<compile_context>
chip_gen: v5e
topology: v5e:2x2
jax: 0.10.0
libtpu: 0.0.40
codegen_flags: <defaults>
</compile_context>

<pallas_src>
import math

import numpy as np
import jax
import jax.numpy as jnp
from jax.experimental import pallas as pl
from jax.experimental.pallas import tpu as pltpu


OUT_PAD = 128          # lane-dense padded width of the single output slab
MIB = 1 << 20


# ----------------------------- activations ---------------------------------
def _silu(x):
    return x * jax.nn.sigmoid(x)


def _mish(x):
    return x * jnp.tanh(jax.nn.softplus(x))


# ------------------------------ Pallas kernel -------------------------------
def make_film_kernel(num_blocks: int, mid_dim: int):
    """Fused forward kernel, statically unrolled over the num_blocks+1 blocks.

    Ref order (inputs):
      zcat [TB, 2E], cond [TB, E],
      wcs_all, bcs_all, wcb_all, bcb_all,            # fused FiLM scale / bias slabs
      [w1_i, b1_i, w2_i, b2_i] for i in 0..num_blocks,
      wo_pad, bo_pad                                 # head slab (id cols 0..5 + real cols 6..7), padded to OUT_PAD
    Output: head_out [TB, OUT_PAD]
    """
    n_blocks_total = num_blocks + 1
    n_in = 6 + 4 * n_blocks_total + 2

    # TODO(synk): for num_blocks >= ~8 replace this static unroll with stacked
    # [nb, mid, mid] weights + lax.fori_loop (or a block grid axis) to bound
    # live ranges; at nb <= 4 the unroll is fine.
    def kernel(*refs):
        zcat_ref, cond_ref, wcs_ref, bcs_ref, wcb_ref, bcb_ref = refs[:6]
        blk_refs = refs[6:6 + 4 * n_blocks_total]
        wo_ref, bo_ref = refs[n_in - 2], refs[n_in - 1]
        head_ref = refs[n_in]

        f32, bf16 = jnp.float32, jnp.bfloat16

        # Mish(cond) is loop-invariant -> ONE fused FiLM projection pair for
        # all blocks; scale and bias slabs are separate so every per-block
        # slice below stays lane-aligned (mid_dim % 128 == 0).
        mc = _mish(cond_ref[...]).astype(bf16)
        scale_all = (jnp.dot(mc, wcs_ref[...], preferred_element_type=f32)
                     + bcs_ref[...])
        bias_all = (jnp.dot(mc, wcb_ref[...], preferred_element_type=f32)
                    + bcb_ref[...])

        x = zcat_ref[...]
        for bi in range(n_blocks_total):
            w1, b1, w2, b2 = (r[...] for r in blk_refs[4 * bi: 4 * bi + 4])
            lo = bi * mid_dim
            h1 = jnp.dot(x.astype(bf16), w1, preferred_element_type=f32) + b1
            h2 = (scale_all[:, lo:lo + mid_dim] * h1
                  + bias_all[:, lo:lo + mid_dim])
            x = jnp.maximum(
                jnp.dot(h2.astype(bf16), w2, preferred_element_type=f32) + b2,
                0.0)

        # Head slab: columns 0..5 pass x[:, :6] through (identity columns in
        # wo_pad), 6..7 are the real to_out gripper / ignore_collisions
        # logits, rest is zero padding -> one unmasked lane-dense store.
        head_ref[...] = (jnp.dot(x.astype(bf16), wo_ref[...],
                                 preferred_element_type=f32) + bo_ref[...])

    return kernel


# --------------------------- parameter packing -------------------------------
def pack_params(params, *, embed_dim, mid_dim):
    """Module-layout params -> fused kernel layout (bf16 MXU weights).

    The head slab wo_pad gets a 6-column identity pass-through of x[:, :6]
    (the model's `v`); to_out columns 0..5 are never read by the wrapper, so
    the kernel only needs a single lane-dense output.
    """
    assert mid_dim % 128 == 0, "mid_dim must be a multiple of 128"
    bf16 = jnp.bfloat16
    blocks = params["blocks"]

    # Fused FiLM cond-encoder weights, split into scale / bias slabs so the
    # kernel never slices inside a 128-lane vreg at the mid_dim boundary.
    wcs = jnp.concatenate([b["wc"][:, :mid_dim] for b in blocks], 1).astype(bf16)
    wcb = jnp.concatenate([b["wc"][:, mid_dim:] for b in blocks], 1).astype(bf16)
    bcs = jnp.concatenate([b["bc"][:, :mid_dim] for b in blocks], 1)
    bcb = jnp.concatenate([b["bc"][:, mid_dim:] for b in blocks], 1)

    out_dim = params["wo"].shape[1]
    wo_pad = jnp.zeros((mid_dim, OUT_PAD), jnp.float32)
    wo_pad = wo_pad.at[:, :6].set(jnp.eye(mid_dim, 6, dtype=jnp.float32))
    wo_pad = wo_pad.at[:, 6:out_dim].set(params["wo"][:, 6:])
    bo_pad = jnp.zeros((1, OUT_PAD), jnp.float32)
    bo_pad = bo_pad.at[:, 6:out_dim].set(params["bo"][:, 6:])

    blk_list = []
    for b in blocks:
        blk_list += [b["w1"].astype(bf16), b["b1"],
                     b["w2"].astype(bf16), b["b2"]]

    return {"we": params["we"], "be": params["be"],     # embed stays f32 (wrapper)
            "wcs": wcs, "bcs": bcs, "wcb": wcb, "bcb": bcb,
            "blocks": blk_list,
            "wo": wo_pad.astype(bf16), "bo": bo_pad}


# ------------------------- VMEM-aware tile selection -------------------------
def _round_up(x, m):
    return ((x + m - 1) // m) * m


def _vmem_step_bytes(tb, weight_bytes, embed_dim, mid_dim, num_blocks,
                     weight_bufs):
    """Rough per-grid-step VMEM footprint estimate."""
    act_in = tb * (3 * embed_dim) * 4 * 2                 # zcat + cond, 2 bufs
    act_out = tb * OUT_PAD * 4 * 2                        # head, 2 bufs
    slabs = 2 * tb * (num_blocks + 1) * mid_dim * 4       # scale_all / bias_all
    temps = 4 * tb * mid_dim * 4                          # h1 / h2 / x live vals
    return weight_bytes * weight_bufs + act_in + act_out + slabs + temps


def _choose_batch_tile(B, *, weight_bytes, embed_dim, mid_dim, num_blocks,
                       vmem_budget):
    # Multiple of 16 (bf16 sublane packing), >= 2 grid steps when B allows it
    # (so v7x's second TensorCore gets work), capped at 512 and by the VMEM
    # budget (conservatively assuming double-buffered weights).
    if B <= 16:
        tb = _round_up(max(B, 8), 8)
    else:
        tb = min(512, _round_up(-(-B // 2), 16))
    while tb > 16 and _vmem_step_bytes(tb, weight_bytes, embed_dim, mid_dim,
                                       num_blocks, 2) > vmem_budget:
        tb -= 16
    return tb


# ------------------------------- wrapper -------------------------------------
def naive_film_forward(packed, rot, pos, k, global_cond, *, embed_dim, mid_dim,
                       num_blocks):
    assert mid_dim % 128 == 0, \
        "mid_dim must be a multiple of 128 (lane-aligned FiLM slab slices)"
    # NOTE: a mid_dim that is a multiple of 256 fills the 256-wide MXU on
    # v6e/v7x; 128 only fully uses v5e's 128x128 MXU.

    B = rot.shape[0]
    H = jnp.concatenate([rot.reshape(B, -1), pos.reshape(B, -1)], axis=-1)

    # self.embed: Linear(in_channels, embed_dim) + SiLU.  K = in_channels is
    # tiny and odd -> cheaper as plain XLA glue than a ragged in-kernel dot.
    z = _silu(jnp.dot(H, packed["we"], preferred_element_type=jnp.float32)
              + packed["be"])

    # SinusoidalPosEmb (elementwise glue, plain JAX)
    half = embed_dim // 2
    freqs = jnp.exp(jnp.arange(half, dtype=jnp.float32)
                    * (-math.log(10000.0) / (half - 1)))
    ang = k.astype(jnp.float32)[:, None] * freqs[None, :]
    z_time = jnp.concatenate([jnp.sin(ang), jnp.cos(ang)], axis=-1)

    zcat = jnp.concatenate([z, z_time], axis=-1)          # [B, 2*embed_dim]

    weight_arrays = [packed["wcs"], packed["bcs"], packed["wcb"], packed["bcb"],
                     *packed["blocks"], packed["wo"], packed["bo"]]
    weight_bytes = sum(int(np.prod(a.shape)) * a.dtype.itemsize
                       for a in weight_arrays)

    # ---- VMEM-aware batch tile (v7x: 64 MiB physical, v5e/v6e: 128 MiB)
    vmem_cap = 64 * MIB
    try:
        vmem_cap = int(getattr(pltpu.get_tpu_info(), "vmem_capacity_bytes",
                               vmem_cap))
    except Exception:
        pass
    budget = (vmem_cap * 3) // 4                           # keep 25% headroom
    tb = _choose_batch_tile(B, weight_bytes=weight_bytes, embed_dim=embed_dim,
                            mid_dim=mid_dim, num_blocks=num_blocks,
                            vmem_budget=budget)

    # ragged batches: pad internally, slice the result back afterwards
    b_pad = _round_up(B, tb)
    if b_pad != B:
        pad = b_pad - B
        zcat = jnp.pad(zcat, ((0, pad), (0, 0)))
        cond = jnp.pad(global_cond, ((0, pad), (0, 0)))
    else:
        cond = global_cond
    grid = (b_pad // tb,)

    inputs = [zcat, cond, *weight_arrays]

    est = _vmem_step_bytes(tb, weight_bytes, embed_dim, mid_dim, num_blocks, 2)
    vmem_limit = int(min(vmem_cap - 4 * MIB, max(32 * MIB, 2 * est)))

    flops = 2 * b_pad * (
        2 * embed_dim * mid_dim                          # block 0 w1 (K = 2E)
        + 2 * embed_dim * (num_blocks + 1) * mid_dim     # fused FiLM scale+bias
        + num_blocks * mid_dim * mid_dim                 # blocks 1..nb w1
        + (num_blocks + 1) * mid_dim * mid_dim           # every block's w2
        + mid_dim * OUT_PAD)                             # head slab
    cost = pl.CostEstimate(
        flops=int(flops),
        transcendentals=int(3 * b_pad * embed_dim),      # Mish (tanh/softplus)
        bytes_accessed=int(weight_bytes
                           + b_pad * (3 * embed_dim + OUT_PAD) * 4))

    kernel = make_film_kernel(num_blocks, mid_dim)

    def build(single_buffer_weights):
        def act_spec(width):
            return pl.BlockSpec((tb, width), lambda i: (i, 0))

        def w_spec(arr):
            if single_buffer_weights:
                # Grid-invariant weights: block index never changes, so one
                # VMEM buffer suffices (halves weight VMEM vs default 2-deep).
                return pl.BlockSpec(arr.shape, lambda i: (0, 0),
                                    pipeline_mode=pl.Buffered(1))
            return pl.BlockSpec(arr.shape, lambda i: (0, 0))

        return pl.pallas_call(
            kernel,
            out_shape=jax.ShapeDtypeStruct((b_pad, OUT_PAD), jnp.float32),
            grid_spec=pltpu.PrefetchScalarGridSpec(
                num_scalar_prefetch=0,
                grid=grid,
                in_specs=([act_spec(2 * embed_dim), act_spec(embed_dim)]
                          + [w_spec(a) for a in weight_arrays]),
                out_specs=pl.BlockSpec((tb, OUT_PAD), lambda i: (i, 0))),
            compiler_params=pltpu.CompilerParams(
                dimension_semantics=("parallel",),
                vmem_limit_bytes=vmem_limit),
            cost_estimate=cost,
        )

    # TODO(synk): when this head runs inside a flow-matching sampling loop,
    # fuse the timesteps into one pallas_call (step grid axis marked
    # "arbitrary", weights resident across steps, z_time recomputed in-kernel
    # from a scalar-prefetched k) so weights are not re-DMA'd every step.
    try:
        head = build(single_buffer_weights=True)(*inputs)
    except Exception:
        # Fallback if this jax build rejects pipeline_mode=pl.Buffered(1) on
        # top-level pallas_call BlockSpecs: default double-buffering.
        head = build(single_buffer_weights=False)(*inputs)

    head = head[:B]
    return {
        "v": head[:, None, :6],                          # [B, 1, 6] (from x)
        "gripper": jax.nn.sigmoid(head[:, 6:7]),         # [B, 1]
        "ignore_collisions": jax.nn.sigmoid(head[:, 7:8]),
    }


# ----------------------- deterministic parameter init ------------------------
def _linear_params(key, fan_in, fan_out):
    kw, kb = jax.random.split(key)
    bound = 1.0 / math.sqrt(fan_in)
    w = jax.random.uniform(kw, (fan_in, fan_out), jnp.float32, -bound, bound)
    b = jax.random.uniform(kb, (1, fan_out), jnp.float32, -bound, bound)
    return w, b


def init_params(key, in_channels, embed_dim, mid_dim, num_blocks, out_dim):
    keys = jax.random.split(key, 2 + num_blocks + 1)
    we, be = _linear_params(keys[0], in_channels, embed_dim)
    wo, bo = _linear_params(keys[1], mid_dim, out_dim)
    blocks = []
    for bi in range(num_blocks + 1):
        in_dim = 2 * embed_dim if bi == 0 else mid_dim
        k1, kc, k2 = jax.random.split(keys[2 + bi], 3)
        w1, b1 = _linear_params(k1, in_dim, mid_dim)
        wc, bc = _linear_params(kc, embed_dim, 2 * mid_dim)
        w2, b2 = _linear_params(k2, mid_dim, mid_dim)
        blocks.append(dict(w1=w1, b1=b1, wc=wc, bc=bc, w2=w2, b2=b2))
    return dict(we=we, be=be, blocks=blocks, wo=wo, bo=bo)


# --------------------------- pure-JAX reference ------------------------------
def reference_forward(params, rot, pos, k, cond, *, embed_dim, mid_dim):
    """Pure-JAX reference mirroring the kernel numerics: bf16 MXU operands
    with f32 accumulation, f32 elementwise math (embed matmul kept f32)."""
    bf16, f32 = jnp.bfloat16, jnp.float32

    def mm(a, w):  # bf16-operand / f32-accumulate matmul
        return jnp.dot(a.astype(bf16), w.astype(bf16),
                       preferred_element_type=f32)

    B = rot.shape[0]
    H = jnp.concatenate([rot.reshape(B, -1), pos.reshape(B, -1)], axis=-1)
    half = embed_dim // 2
    freqs = jnp.exp(jnp.arange(half, dtype=jnp.float32)
                    * (-math.log(10000.0) / (half - 1)))
    ang = k[:, None] * freqs[None, :]
    zt = jnp.concatenate([jnp.sin(ang), jnp.cos(ang)], axis=-1)

    z = _silu(jnp.dot(H, params["we"], preferred_element_type=f32)
              + params["be"])
    mc = _mish(cond)
    x = jnp.concatenate([z, zt], axis=-1)
    for blk in params["blocks"]:
        h1 = mm(x, blk["w1"]) + blk["b1"]
        film = mm(mc, blk["wc"]) + blk["bc"]
        scale, bias = film[:, :mid_dim], film[:, mid_dim:]
        h2 = scale * h1 + bias
        x = jnp.maximum(mm(h2, blk["w2"]) + blk["b2"], 0.0)
    out = mm(x, params["wo"]) + params["bo"]
    return {
        "v": x[:, None, :6],
        "gripper": jax.nn.sigmoid(out[:, 6:7]),
        "ignore_collisions": jax.nn.sigmoid(out[:, 7:8]),
    }


# ---------------------------------- main --------------------------------------
if __name__ == "__main__":
    # small shapes consistent with the module (defaults 128/256/4 scaled down);
    # mid_dim a multiple of 128 so FiLM slices stay lane-aligned.  B is ragged
    # on purpose to exercise the internal batch padding.
    B = 12
    embed_dim = 64
    mid_dim = 128
    num_blocks = 2
    rot_dim, pos_dim = 4, 3          # quaternion + xyz
    in_channels = rot_dim + pos_dim  # 7
    out_dim = 6 + 1 + 1              # gripper_out=True, ignore_collisions_out=True

    key = jax.random.PRNGKey(0)
    kp, kr, kps, kk, kc = jax.random.split(key, 5)
    params = init_params(kp, in_channels, embed_dim, mid_dim, num_blocks,
                         out_dim)
    rot = jax.random.normal(kr, (B, rot_dim), jnp.float32)
    pos = jax.random.normal(kps, (B, pos_dim), jnp.float32)
    k = jax.random.uniform(kk, (B,), jnp.float32, 0.0, 1.0)
    global_cond = jax.random.normal(kc, (B, embed_dim), jnp.float32)

    packed = pack_params(params, embed_dim=embed_dim, mid_dim=mid_dim)

    out = naive_film_forward(packed, rot, pos, k, global_cond,
                             embed_dim=embed_dim, mid_dim=mid_dim,
                             num_blocks=num_blocks)
    out = jax.block_until_ready(out)

    ref = reference_forward(params, rot, pos, k, global_cond,
                            embed_dim=embed_dim, mid_dim=mid_dim)
    np.testing.assert_allclose(np.asarray(out["v"]), np.asarray(ref["v"]),
                               rtol=5e-3, atol=5e-3)
    np.testing.assert_allclose(np.asarray(out["gripper"]),
                               np.asarray(ref["gripper"]),
                               rtol=5e-3, atol=5e-3)
    np.testing.assert_allclose(np.asarray(out["ignore_collisions"]),
                               np.asarray(ref["ignore_collisions"]),
                               rtol=5e-3, atol=5e-3)

    print("KERNEL_OK")
</pallas_src>

<mosaic_0001>
module attributes {stable_mosaic.version = 11 : i64} {
  func.func @kernel(%arg0: i32, %arg1: memref<16x128xf32, #tpu.memory_space<vmem>>, %arg2: memref<16x64xf32, #tpu.memory_space<vmem>>, %arg3: memref<64x384xbf16, #tpu.memory_space<vmem>>, %arg4: memref<1x384xf32, #tpu.memory_space<vmem>>, %arg5: memref<64x384xbf16, #tpu.memory_space<vmem>>, %arg6: memref<1x384xf32, #tpu.memory_space<vmem>>, %arg7: memref<128x128xbf16, #tpu.memory_space<vmem>>, %arg8: memref<1x128xf32, #tpu.memory_space<vmem>>, %arg9: memref<128x128xbf16, #tpu.memory_space<vmem>>, %arg10: memref<1x128xf32, #tpu.memory_space<vmem>>, %arg11: memref<128x128xbf16, #tpu.memory_space<vmem>>, %arg12: memref<1x128xf32, #tpu.memory_space<vmem>>, %arg13: memref<128x128xbf16, #tpu.memory_space<vmem>>, %arg14: memref<1x128xf32, #tpu.memory_space<vmem>>, %arg15: memref<128x128xbf16, #tpu.memory_space<vmem>>, %arg16: memref<1x128xf32, #tpu.memory_space<vmem>>, %arg17: memref<128x128xbf16, #tpu.memory_space<vmem>>, %arg18: memref<1x128xf32, #tpu.memory_space<vmem>>, %arg19: memref<128x128xbf16, #tpu.memory_space<vmem>>, %arg20: memref<1x128xf32, #tpu.memory_space<vmem>>, %arg21: memref<16x128xf32, #tpu.memory_space<vmem>>) attributes {dimension_semantics = [#tpu.dimension_semantics<parallel>], iteration_bounds = array<i64: 1>, scalar_prefetch = 0 : i64, scratch_operands = 0 : i64, tpu.core_type = #tpu.core_type<tc>, window_params = [{transform_indices = @transform_0, window_bounds = array<i64: 16, 128>}, {transform_indices = @transform_1, window_bounds = array<i64: 16, 64>}, {pipeline_mode = #tpu.pipeline_mode<synchronous>, transform_indices = @transform_2, window_bounds = array<i64: 64, 384>}, {pipeline_mode = #tpu.pipeline_mode<synchronous>, transform_indices = @transform_3, window_bounds = array<i64: 1, 384>}, {pipeline_mode = #tpu.pipeline_mode<synchronous>, transform_indices = @transform_4, window_bounds = array<i64: 64, 384>}, {pipeline_mode = #tpu.pipeline_mode<synchronous>, transform_indices = @transform_5, window_bounds = array<i64: 1, 384>}, {pipeline_mode = #tpu.pipeline_mode<synchronous>, transform_indices = @transform_6, window_bounds = array<i64: 128, 128>}, {pipeline_mode = #tpu.pipeline_mode<synchronous>, transform_indices = @transform_7, window_bounds = array<i64: 1, 128>}, {pipeline_mode = #tpu.pipeline_mode<synchronous>, transform_indices = @transform_8, window_bounds = array<i64: 128, 128>}, {pipeline_mode = #tpu.pipeline_mode<synchronous>, transform_indices = @transform_9, window_bounds = array<i64: 1, 128>}, {pipeline_mode = #tpu.pipeline_mode<synchronous>, transform_indices = @transform_10, window_bounds = array<i64: 128, 128>}, {pipeline_mode = #tpu.pipeline_mode<synchronous>, transform_indices = @transform_11, window_bounds = array<i64: 1, 128>}, {pipeline_mode = #tpu.pipeline_mode<synchronous>, transform_indices = @transform_12, window_bounds = array<i64: 128, 128>}, {pipeline_mode = #tpu.pipeline_mode<synchronous>, transform_indices = @transform_13, window_bounds = array<i64: 1, 128>}, {pipeline_mode = #tpu.pipeline_mode<synchronous>, transform_indices = @transform_14, window_bounds = array<i64: 128, 128>}, {pipeline_mode = #tpu.pipeline_mode<synchronous>, transform_indices = @transform_15, window_bounds = array<i64: 1, 128>}, {pipeline_mode = #tpu.pipeline_mode<synchronous>, transform_indices = @transform_16, window_bounds = array<i64: 128, 128>}, {pipeline_mode = #tpu.pipeline_mode<synchronous>, transform_indices = @transform_17, window_bounds = array<i64: 1, 128>}, {pipeline_mode = #tpu.pipeline_mode<synchronous>, transform_indices = @transform_18, window_bounds = array<i64: 128, 128>}, {pipeline_mode = #tpu.pipeline_mode<synchronous>, transform_indices = @transform_19, window_bounds = array<i64: 1, 128>}, {transform_indices = @transform_20, window_bounds = array<i64: 16, 128>}]} {
    %c0 = arith.constant 0 : index
    %c0_0 = arith.constant 0 : index
    %0 = vector.load %arg2[%c0, %c0_0] : memref<16x64xf32, #tpu.memory_space<vmem>>, vector<16x64xf32>
    %cst = arith.constant 0.000000e+00 : f32
    %1 = vector.broadcast %cst : f32 to vector<16x64xf32>
    %2 = arith.maximumf %0, %1 : vector<16x64xf32>
    %3 = vector.broadcast %cst : f32 to vector<16x64xf32>
    %4 = arith.subf %0, %3 : vector<16x64xf32>
    %5 = arith.cmpf one, %4, %4 : vector<16x64xf32>
    %6 = vector.broadcast %cst : f32 to vector<16x64xf32>
    %7 = arith.addf %0, %6 : vector<16x64xf32>
    %8 = math.absf %4 : vector<16x64xf32>
    %cst_1 = arith.constant 0.000000e+00 : f32
    %9 = vector.broadcast %cst_1 : f32 to vector<16x64xf32>
    %10 = arith.subf %9, %8 : vector<16x64xf32>
    %11 = math.exp %10 : vector<16x64xf32>
    %12 = math.log1p %11 : vector<16x64xf32>
    %13 = arith.addf %2, %12 : vector<16x64xf32>
    %14 = arith.select %5, %7, %13 : vector<16x64xi1>, vector<16x64xf32>
    %15 = math.tanh %14 : vector<16x64xf32>
    %16 = arith.mulf %0, %15 : vector<16x64xf32>
    %17 = arith.truncf %16 : vector<16x64xf32> to vector<16x64xbf16>
    %c0_2 = arith.constant 0 : index
    %c0_3 = arith.constant 0 : index
    %18 = vector.load %arg3[%c0_2, %c0_3] : memref<64x384xbf16, #tpu.memory_space<vmem>>, vector<64x384xbf16>
    %cst_4 = arith.constant dense<0.000000e+00> : vector<16x384xf32>
    %19 = tpu.matmul %17, %18, %cst_4 {dimension_numbers = #tpu.dot_dimension_numbers<[1], [0], [0], [1], [0, 0, 1, 1], [], []>} : vector<16x64xbf16>, vector<64x384xbf16>, vector<16x384xf32> -> vector<16x384xf32>
    %c0_5 = arith.constant 0 : index
    %c0_6 = arith.constant 0 : index
    %20 = vector.load %arg4[%c0_5, %c0_6] : memref<1x384xf32, #tpu.memory_space<vmem>>, vector<1x384xf32>
    %21 = vector.broadcast %20 : vector<1x384xf32> to vector<16x384xf32>
    %22 = arith.addf %19, %21 : vector<16x384xf32>
    %c0_7 = arith.constant 0 : index
    %c0_8 = arith.constant 0 : index
    %23 = vector.load %arg5[%c0_7, %c0_8] : memref<64x384xbf16, #tpu.memory_space<vmem>>, vector<64x384xbf16>
    %cst_9 = arith.constant dense<0.000000e+00> : vector<16x384xf32>
    %24 = tpu.matmul %17, %23, %cst_9 {dimension_numbers = #tpu.dot_dimension_numbers<[1], [0], [0], [1], [0, 0, 1, 1], [], []>} : vector<16x64xbf16>, vector<64x384xbf16>, vector<16x384xf32> -> vector<16x384xf32>
    %c0_10 = arith.constant 0 : index
    %c0_11 = arith.constant 0 : index
    %25 = vector.load %arg6[%c0_10, %c0_11] : memref<1x384xf32, #tpu.memory_space<vmem>>, vector<1x384xf32>
    %26 = vector.broadcast %25 : vector<1x384xf32> to vector<16x384xf32>
    %27 = arith.addf %24, %26 : vector<16x384xf32>
    %c0_12 = arith.constant 0 : index
    %c0_13 = arith.constant 0 : index
    %28 = vector.load %arg1[%c0_12, %c0_13] : memref<16x128xf32, #tpu.memory_space<vmem>>, vector<16x128xf32>
    %c0_14 = arith.constant 0 : index
    %c0_15 = arith.constant 0 : index
    %29 = vector.load %arg7[%c0_14, %c0_15] : memref<128x128xbf16, #tpu.memory_space<vmem>>, vector<128x128xbf16>
    %c0_16 = arith.constant 0 : index
    %c0_17 = arith.constant 0 : index
    %30 = vector.load %arg8[%c0_16, %c0_17] : memref<1x128xf32, #tpu.memory_space<vmem>>, vector<1x128xf32>
    %c0_18 = arith.constant 0 : index
    %c0_19 = arith.constant 0 : index
    %31 = vector.load %arg9[%c0_18, %c0_19] : memref<128x128xbf16, #tpu.memory_space<vmem>>, vector<128x128xbf16>
    %c0_20 = arith.constant 0 : index
    %c0_21 = arith.constant 0 : index
    %32 = vector.load %arg10[%c0_20, %c0_21] : memref<1x128xf32, #tpu.memory_space<vmem>>, vector<1x128xf32>
    %33 = arith.truncf %28 : vector<16x128xf32> to vector<16x128xbf16>
    %cst_22 = arith.constant dense<0.000000e+00> : vector<16x128xf32>
    %34 = tpu.matmul %33, %29, %cst_22 {dimension_numbers = #tpu.dot_dimension_numbers<[1], [0], [0], [1], [0, 0, 1, 1], [], []>} : vector<16x128xbf16>, vector<128x128xbf16>, vector<16x128xf32> -> vector<16x128xf32>
    %35 = vector.broadcast %30 : vector<1x128xf32> to vector<16x128xf32>
    %36 = arith.addf %34, %35 : vector<16x128xf32>
    %37 = vector.extract_strided_slice %22 {offsets = [0, 0], sizes = [16, 128], strides = [1, 1]} : vector<16x384xf32> to vector<16x128xf32>
    %38 = arith.mulf %37, %36 : vector<16x128xf32>
    %39 = vector.extract_strided_slice %27 {offsets = [0, 0], sizes = [16, 128], strides = [1, 1]} : vector<16x384xf32> to vector<16x128xf32>
    %40 = arith.addf %38, %39 : vector<16x128xf32>
    %41 = arith.truncf %40 : vector<16x128xf32> to vector<16x128xbf16>
    %cst_23 = arith.constant dense<0.000000e+00> : vector<16x128xf32>
    %42 = tpu.matmul %41, %31, %cst_23 {dimension_numbers = #tpu.dot_dimension_numbers<[1], [0], [0], [1], [0, 0, 1, 1], [], []>} : vector<16x128xbf16>, vector<128x128xbf16>, vector<16x128xf32> -> vector<16x128xf32>
    %43 = vector.broadcast %32 : vector<1x128xf32> to vector<16x128xf32>
    %44 = arith.addf %42, %43 : vector<16x128xf32>
    %cst_24 = arith.constant 0.000000e+00 : f32
    %45 = vector.broadcast %cst_24 : f32 to vector<16x128xf32>
    %46 = arith.maximumf %44, %45 : vector<16x128xf32>
    %c0_25 = arith.constant 0 : index
    %c0_26 = arith.constant 0 : index
    %47 = vector.load %arg11[%c0_25, %c0_26] : memref<128x128xbf16, #tpu.memory_space<vmem>>, vector<128x128xbf16>
    %c0_27 = arith.constant 0 : index
    %c0_28 = arith.constant 0 : index
    %48 = vector.load %arg12[%c0_27, %c0_28] : memref<1x128xf32, #tpu.memory_space<vmem>>, vector<1x128xf32>
    %c0_29 = arith.constant 0 : index
    %c0_30 = arith.constant 0 : index
    %49 = vector.load %arg13[%c0_29, %c0_30] : memref<128x128xbf16, #tpu.memory_space<vmem>>, vector<128x128xbf16>
    %c0_31 = arith.constant 0 : index
    %c0_32 = arith.constant 0 : index
    %50 = vector.load %arg14[%c0_31, %c0_32] : memref<1x128xf32, #tpu.memory_space<vmem>>, vector<1x128xf32>
    %51 = arith.truncf %46 : vector<16x128xf32> to vector<16x128xbf16>
    %cst_33 = arith.constant dense<0.000000e+00> : vector<16x128xf32>
    %52 = tpu.matmul %51, %47, %cst_33 {dimension_numbers = #tpu.dot_dimension_numbers<[1], [0], [0], [1], [0, 0, 1, 1], [], []>} : vector<16x128xbf16>, vector<128x128xbf16>, vector<16x128xf32> -> vector<16x128xf32>
    %53 = vector.broadcast %48 : vector<1x128xf32> to vector<16x128xf32>
    %54 = arith.addf %52, %53 : vector<16x128xf32>
    %55 = vector.extract_strided_slice %22 {offsets = [0, 128], sizes = [16, 128], strides = [1, 1]} : vector<16x384xf32> to vector<16x128xf32>
    %56 = arith.mulf %55, %54 : vector<16x128xf32>
    %57 = vector.extract_strided_slice %27 {offsets = [0, 128], sizes = [16, 128], strides = [1, 1]} : vector<16x384xf32> to vector<16x128xf32>
    %58 = arith.addf %56, %57 : vector<16x128xf32>
    %59 = arith.truncf %58 : vector<16x128xf32> to vector<16x128xbf16>
    %cst_34 = arith.constant dense<0.000000e+00> : vector<16x128xf32>
    %60 = tpu.matmul %59, %49, %cst_34 {dimension_numbers = #tpu.dot_dimension_numbers<[1], [0], [0], [1], [0, 0, 1, 1], [], []>} : vector<16x128xbf16>, vector<128x128xbf16>, vector<16x128xf32> -> vector<16x128xf32>
    %61 = vector.broadcast %50 : vector<1x128xf32> to vector<16x128xf32>
    %62 = arith.addf %60, %61 : vector<16x128xf32>
    %cst_35 = arith.constant 0.000000e+00 : f32
    %63 = vector.broadcast %cst_35 : f32 to vector<16x128xf32>
    %64 = arith.maximumf %62, %63 : vector<16x128xf32>
    %c0_36 = arith.constant 0 : index
    %c0_37 = arith.constant 0 : index
    %65 = vector.load %arg15[%c0_36, %c0_37] : memref<128x128xbf16, #tpu.memory_space<vmem>>, vector<128x128xbf16>
    %c0_38 = arith.constant 0 : index
    %c0_39 = arith.constant 0 : index
    %66 = vector.load %arg16[%c0_38, %c0_39] : memref<1x128xf32, #tpu.memory_space<vmem>>, vector<1x128xf32>
    %c0_40 = arith.constant 0 : index
    %c0_41 = arith.constant 0 : index
    %67 = vector.load %arg17[%c0_40, %c0_41] : memref<128x128xbf16, #tpu.memory_space<vmem>>, vector<128x128xbf16>
    %c0_42 = arith.constant 0 : index
    %c0_43 = arith.constant 0 : index
    %68 = vector.load %arg18[%c0_42, %c0_43] : memref<1x128xf32, #tpu.memory_space<vmem>>, vector<1x128xf32>
    %69 = arith.truncf %64 : vector<16x128xf32> to vector<16x128xbf16>
    %cst_44 = arith.constant dense<0.000000e+00> : vector<16x128xf32>
    %70 = tpu.matmul %69, %65, %cst_44 {dimension_numbers = #tpu.dot_dimension_numbers<[1], [0], [0], [1], [0, 0, 1, 1], [], []>} : vector<16x128xbf16>, vector<128x128xbf16>, vector<16x128xf32> -> vector<16x128xf32>
    %71 = vector.broadcast %66 : vector<1x128xf32> to vector<16x128xf32>
    %72 = arith.addf %70, %71 : vector<16x128xf32>
    %73 = vector.extract_strided_slice %22 {offsets = [0, 256], sizes = [16, 128], strides = [1, 1]} : vector<16x384xf32> to vector<16x128xf32>
    %74 = arith.mulf %73, %72 : vector<16x128xf32>
    %75 = vector.extract_strided_slice %27 {offsets = [0, 256], sizes = [16, 128], strides = [1, 1]} : vector<16x384xf32> to vector<16x128xf32>
    %76 = arith.addf %74, %75 : vector<16x128xf32>
    %77 = arith.truncf %76 : vector<16x128xf32> to vector<16x128xbf16>
    %cst_45 = arith.constant dense<0.000000e+00> : vector<16x128xf32>
    %78 = tpu.matmul %77, %67, %cst_45 {dimension_numbers = #tpu.dot_dimension_numbers<[1], [0], [0], [1], [0, 0, 1, 1], [], []>} : vector<16x128xbf16>, vector<128x128xbf16>, vector<16x128xf32> -> vector<16x128xf32>
    %79 = vector.broadcast %68 : vector<1x128xf32> to vector<16x128xf32>
    %80 = arith.addf %78, %79 : vector<16x128xf32>
    %cst_46 = arith.constant 0.000000e+00 : f32
    %81 = vector.broadcast %cst_46 : f32 to vector<16x128xf32>
    %82 = arith.maximumf %80, %81 : vector<16x128xf32>
    %83 = arith.truncf %82 : vector<16x128xf32> to vector<16x128xbf16>
    %c0_47 = arith.constant 0 : index
    %c0_48 = arith.constant 0 : index
    %84 = vector.load %arg19[%c0_47, %c0_48] : memref<128x128xbf16, #tpu.memory_space<vmem>>, vector<128x128xbf16>
    %cst_49 = arith.constant dense<0.000000e+00> : vector<16x128xf32>
    %85 = tpu.matmul %83, %84, %cst_49 {dimension_numbers = #tpu.dot_dimension_numbers<[1], [0], [0], [1], [0, 0, 1, 1], [], []>} : vector<16x128xbf16>, vector<128x128xbf16>, vector<16x128xf32> -> vector<16x128xf32>
    %c0_50 = arith.constant 0 : index
    %c0_51 = arith.constant 0 : index
    %86 = vector.load %arg20[%c0_50, %c0_51] : memref<1x128xf32, #tpu.memory_space<vmem>>, vector<1x128xf32>
    %87 = vector.broadcast %86 : vector<1x128xf32> to vector<16x128xf32>
    %88 = arith.addf %85, %87 : vector<16x128xf32>
    %c0_52 = arith.constant 0 : index
    %c0_53 = arith.constant 0 : index
    %89 = vector.load %arg21[%c0_52, %c0_53] : memref<16x128xf32, #tpu.memory_space<vmem>>, vector<16x128xf32>
    tpu.vector_store %arg21[%c0_52, %c0_53], %88 {strides = array<i32>} : memref<16x128xf32, #tpu.memory_space<vmem>>, vector<16x128xf32>,
    return
  }
  func.func @transform_0(%arg0: i32) -> (i32, i32) {
    %c0_i32 = arith.constant 0 : i32
    %c0_i32_0 = arith.constant 0 : i32
    return %arg0, %c0_i32 : i32, i32
  }
  func.func @transform_1(%arg0: i32) -> (i32, i32) {
    %c0_i32 = arith.constant 0 : i32
    %c0_i32_0 = arith.constant 0 : i32
    return %arg0, %c0_i32 : i32, i32
  }
  func.func @transform_2(%arg0: i32) -> (i32, i32) {
    %c0_i32 = arith.constant 0 : i32
    %c0_i32_0 = arith.constant 0 : i32
    %c0_i32_1 = arith.constant 0 : i32
    return %c0_i32, %c0_i32_0 : i32, i32
  }
  func.func @transform_3(%arg0: i32) -> (i32, i32) {
    %c0_i32 = arith.constant 0 : i32
    %c0_i32_0 = arith.constant 0 : i32
    %c0_i32_1 = arith.constant 0 : i32
    return %c0_i32, %c0_i32_0 : i32, i32
  }
  func.func @transform_4(%arg0: i32) -> (i32, i32) {
    %c0_i32 = arith.constant 0 : i32
    %c0_i32_0 = arith.constant 0 : i32
    %c0_i32_1 = arith.constant 0 : i32
    return %c0_i32, %c0_i32_0 : i32, i32
  }
  func.func @transform_5(%arg0: i32) -> (i32, i32) {
    %c0_i32 = arith.constant 0 : i32
    %c0_i32_0 = arith.constant 0 : i32
    %c0_i32_1 = arith.constant 0 : i32
    return %c0_i32, %c0_i32_0 : i32, i32
  }
  func.func @transform_6(%arg0: i32) -> (i32, i32) {
    %c0_i32 = arith.constant 0 : i32
    %c0_i32_0 = arith.constant 0 : i32
    %c0_i32_1 = arith.constant 0 : i32
    return %c0_i32, %c0_i32_0 : i32, i32
  }
  func.func @transform_7(%arg0: i32) -> (i32, i32) {
    %c0_i32 = arith.constant 0 : i32
    %c0_i32_0 = arith.constant 0 : i32
    %c0_i32_1 = arith.constant 0 : i32
    return %c0_i32, %c0_i32_0 : i32, i32
  }
  func.func @transform_8(%arg0: i32) -> (i32, i32) {
    %c0_i32 = arith.constant 0 : i32
    %c0_i32_0 = arith.constant 0 : i32
    %c0_i32_1 = arith.constant 0 : i32
    return %c0_i32, %c0_i32_0 : i32, i32
  }
  func.func @transform_9(%arg0: i32) -> (i32, i32) {
    %c0_i32 = arith.constant 0 : i32
    %c0_i32_0 = arith.constant 0 : i32
    %c0_i32_1 = arith.constant 0 : i32
    return %c0_i32, %c0_i32_0 : i32, i32
  }
  func.func @transform_10(%arg0: i32) -> (i32, i32) {
    %c0_i32 = arith.constant 0 : i32
    %c0_i32_0 = arith.constant 0 : i32
    %c0_i32_1 = arith.constant 0 : i32
    return %c0_i32, %c0_i32_0 : i32, i32
  }
  func.func @transform_11(%arg0: i32) -> (i32, i32) {
    %c0_i32 = arith.constant 0 : i32
    %c0_i32_0 = arith.constant 0 : i32
    %c0_i32_1 = arith.constant 0 : i32
    return %c0_i32, %c0_i32_0 : i32, i32
  }
  func.func @transform_12(%arg0: i32) -> (i32, i32) {
    %c0_i32 = arith.constant 0 : i32
    %c0_i32_0 = arith.constant 0 : i32
    %c0_i32_1 = arith.constant 0 : i32
    return %c0_i32, %c0_i32_0 : i32, i32
  }
  func.func @transform_13(%arg0: i32) -> (i32, i32) {
    %c0_i32 = arith.constant 0 : i32
    %c0_i32_0 = arith.constant 0 : i32
    %c0_i32_1 = arith.constant 0 : i32
    return %c0_i32, %c0_i32_0 : i32, i32
  }
  func.func @transform_14(%arg0: i32) -> (i32, i32) {
    %c0_i32 = arith.constant 0 : i32
    %c0_i32_0 = arith.constant 0 : i32
    %c0_i32_1 = arith.constant 0 : i32
    return %c0_i32, %c0_i32_0 : i32, i32
  }
  func.func @transform_15(%arg0: i32) -> (i32, i32) {
    %c0_i32 = arith.constant 0 : i32
    %c0_i32_0 = arith.constant 0 : i32
    %c0_i32_1 = arith.constant 0 : i32
    return %c0_i32, %c0_i32_0 : i32, i32
  }
  func.func @transform_16(%arg0: i32) -> (i32, i32) {
    %c0_i32 = arith.constant 0 : i32
    %c0_i32_0 = arith.constant 0 : i32
    %c0_i32_1 = arith.constant 0 : i32
    return %c0_i32, %c0_i32_0 : i32, i32
  }
  func.func @transform_17(%arg0: i32) -> (i32, i32) {
    %c0_i32 = arith.constant 0 : i32
    %c0_i32_0 = arith.constant 0 : i32
    %c0_i32_1 = arith.constant 0 : i32
    return %c0_i32, %c0_i32_0 : i32, i32
  }
  func.func @transform_18(%arg0: i32) -> (i32, i32) {
    %c0_i32 = arith.constant 0 : i32
    %c0_i32_0 = arith.constant 0 : i32
    %c0_i32_1 = arith.constant 0 : i32
    return %c0_i32, %c0_i32_0 : i32, i32
  }
  func.func @transform_19(%arg0: i32) -> (i32, i32) {
    %c0_i32 = arith.constant 0 : i32
    %c0_i32_0 = arith.constant 0 : i32
    %c0_i32_1 = arith.constant 0 : i32
    return %c0_i32, %c0_i32_0 : i32, i32
  }
  func.func @transform_20(%arg0: i32) -> (i32, i32) {
    %c0_i32 = arith.constant 0 : i32
    %c0_i32_0 = arith.constant 0 : i32
    return %arg0, %c0_i32 : i32, i32
  }
}

module attributes {stable_mosaic.version = 11 : i64} {
  func.func @kernel(%arg0: i32, %arg1: memref<16x128xf32, #tpu.memory_space<vmem>>, %arg2: memref<16x64xf32, #tpu.memory_space<vmem>>, %arg3: memref<64x384xbf16, #tpu.memory_space<vmem>>, %arg4: memref<1x384xf32, #tpu.memory_space<vmem>>, %arg5: memref<64x384xbf16, #tpu.memory_space<vmem>>, %arg6: memref<1x384xf32, #tpu.memory_space<vmem>>, %arg7: memref<128x128xbf16, #tpu.memory_space<vmem>>, %arg8: memref<1x128xf32, #tpu.memory_space<vmem>>, %arg9: memref<128x128xbf16, #tpu.memory_space<vmem>>, %arg10: memref<1x128xf32, #tpu.memory_space<vmem>>, %arg11: memref<128x128xbf16, #tpu.memory_space<vmem>>, %arg12: memref<1x128xf32, #tpu.memory_space<vmem>>, %arg13: memref<128x128xbf16, #tpu.memory_space<vmem>>, %arg14: memref<1x128xf32, #tpu.memory_space<vmem>>, %arg15: memref<128x128xbf16, #tpu.memory_space<vmem>>, %arg16: memref<1x128xf32, #tpu.memory_space<vmem>>, %arg17: memref<128x128xbf16, #tpu.memory_space<vmem>>, %arg18: memref<1x128xf32, #tpu.memory_space<vmem>>, %arg19: memref<128x128xbf16, #tpu.memory_space<vmem>>, %arg20: memref<1x128xf32, #tpu.memory_space<vmem>>, %arg21: memref<16x128xf32, #tpu.memory_space<vmem>>) attributes {dimension_semantics = [#tpu.dimension_semantics<parallel>], iteration_bounds = array<i64: 1>, scalar_prefetch = 0 : i64, scratch_operands = 0 : i64, tpu.core_type = #tpu.core_type<tc>, window_params = [{transform_indices = @transform_0, window_bounds = array<i64: 16, 128>}, {transform_indices = @transform_1, window_bounds = array<i64: 16, 64>}, {pipeline_mode = #tpu.pipeline_mode<synchronous>, transform_indices = @transform_2, window_bounds = array<i64: 64, 384>}, {pipeline_mode = #tpu.pipeline_mode<synchronous>, transform_indices = @transform_3, window_bounds = array<i64: 1, 384>}, {pipeline_mode = #tpu.pipeline_mode<synchronous>, transform_indices = @transform_4, window_bounds = array<i64: 64, 384>}, {pipeline_mode = #tpu.pipeline_mode<synchronous>, transform_indices = @transform_5, window_bounds = array<i64: 1, 384>}, {pipeline_mode = #tpu.pipeline_mode<synchronous>, transform_indices = @transform_6, window_bounds = array<i64: 128, 128>}, {pipeline_mode = #tpu.pipeline_mode<synchronous>, transform_indices = @transform_7, window_bounds = array<i64: 1, 128>}, {pipeline_mode = #tpu.pipeline_mode<synchronous>, transform_indices = @transform_8, window_bounds = array<i64: 128, 128>}, {pipeline_mode = #tpu.pipeline_mode<synchronous>, transform_indices = @transform_9, window_bounds = array<i64: 1, 128>}, {pipeline_mode = #tpu.pipeline_mode<synchronous>, transform_indices = @transform_10, window_bounds = array<i64: 128, 128>}, {pipeline_mode = #tpu.pipeline_mode<synchronous>, transform_indices = @transform_11, window_bounds = array<i64: 1, 128>}, {pipeline_mode = #tpu.pipeline_mode<synchronous>, transform_indices = @transform_12, window_bounds = array<i64: 128, 128>}, {pipeline_mode = #tpu.pipeline_mode<synchronous>, transform_indices = @transform_13, window_bounds = array<i64: 1, 128>}, {pipeline_mode = #tpu.pipeline_mode<synchronous>, transform_indices = @transform_14, window_bounds = array<i64: 128, 128>}, {pipeline_mode = #tpu.pipeline_mode<synchronous>, transform_indices = @transform_15, window_bounds = array<i64: 1, 128>}, {pipeline_mode = #tpu.pipeline_mode<synchronous>, transform_indices = @transform_16, window_bounds = array<i64: 128, 128>}, {pipeline_mode = #tpu.pipeline_mode<synchronous>, transform_indices = @transform_17, window_bounds = array<i64: 1, 128>}, {pipeline_mode = #tpu.pipeline_mode<synchronous>, transform_indices = @transform_18, window_bounds = array<i64: 128, 128>}, {pipeline_mode = #tpu.pipeline_mode<synchronous>, transform_indices = @transform_19, window_bounds = array<i64: 1, 128>}, {transform_indices = @transform_20, window_bounds = array<i64: 16, 128>}]} {
    %c0 = arith.constant 0 : index
    %c0_0 = arith.constant 0 : index
    %0 = vector.load %arg2[%c0, %c0_0] : memref<16x64xf32, #tpu.memory_space<vmem>>, vector<16x64xf32>
    %cst = arith.constant 0.000000e+00 : f32
    %1 = vector.broadcast %cst : f32 to vector<16x64xf32>
    %2 = arith.maximumf %0, %1 : vector<16x64xf32>
    %3 = vector.broadcast %cst : f32 to vector<16x64xf32>
    %4 = arith.subf %0, %3 : vector<16x64xf32>
    %5 = arith.cmpf one, %4, %4 : vector<16x64xf32>
    %6 = vector.broadcast %cst : f32 to vector<16x64xf32>
    %7 = arith.addf %0, %6 : vector<16x64xf32>
    %8 = math.absf %4 : vector<16x64xf32>
    %cst_1 = arith.constant 0.000000e+00 : f32
    %9 = vector.broadcast %cst_1 : f32 to vector<16x64xf32>
    %10 = arith.subf %9, %8 : vector<16x64xf32>
    %11 = math.exp %10 : vector<16x64xf32>
    %12 = math.log1p %11 : vector<16x64xf32>
    %13 = arith.addf %2, %12 : vector<16x64xf32>
    %14 = arith.select %5, %7, %13 : vector<16x64xi1>, vector<16x64xf32>
    %15 = math.tanh %14 : vector<16x64xf32>
    %16 = arith.mulf %0, %15 : vector<16x64xf32>
    %17 = arith.truncf %16 : vector<16x64xf32> to vector<16x64xbf16>
    %c0_2 = arith.constant 0 : index
    %c0_3 = arith.constant 0 : index
    %18 = vector.load %arg3[%c0_2, %c0_3] : memref<64x384xbf16, #tpu.memory_space<vmem>>, vector<64x384xbf16>
    %cst_4 = arith.constant dense<0.000000e+00> : vector<16x384xf32>
    %19 = tpu.matmul %17, %18, %cst_4 {dimension_numbers = #tpu.dot_dimension_numbers<[1], [0], [0], [1], [0, 0, 1, 1], [], []>} : vector<16x64xbf16>, vector<64x384xbf16>, vector<16x384xf32> -> vector<16x384xf32>
    %c0_5 = arith.constant 0 : index
    %c0_6 = arith.constant 0 : index
    %20 = vector.load %arg4[%c0_5, %c0_6] : memref<1x384xf32, #tpu.memory_space<vmem>>, vector<1x384xf32>
    %21 = vector.broadcast %20 : vector<1x384xf32> to vector<16x384xf32>
    %22 = arith.addf %19, %21 : vector<16x384xf32>
    %c0_7 = arith.constant 0 : index
    %c0_8 = arith.constant 0 : index
    %23 = vector.load %arg5[%c0_7, %c0_8] : memref<64x384xbf16, #tpu.memory_space<vmem>>, vector<64x384xbf16>
    %cst_9 = arith.constant dense<0.000000e+00> : vector<16x384xf32>
    %24 = tpu.matmul %17, %23, %cst_9 {dimension_numbers = #tpu.dot_dimension_numbers<[1], [0], [0], [1], [0, 0, 1, 1], [], []>} : vector<16x64xbf16>, vector<64x384xbf16>, vector<16x384xf32> -> vector<16x384xf32>
    %c0_10 = arith.constant 0 : index
    %c0_11 = arith.constant 0 : index
    %25 = vector.load %arg6[%c0_10, %c0_11] : memref<1x384xf32, #tpu.memory_space<vmem>>, vector<1x384xf32>
    %26 = vector.broadcast %25 : vector<1x384xf32> to vector<16x384xf32>
    %27 = arith.addf %24, %26 : vector<16x384xf32>
    %c0_12 = arith.constant 0 : index
    %c0_13 = arith.constant 0 : index
    %28 = vector.load %arg1[%c0_12, %c0_13] : memref<16x128xf32, #tpu.memory_space<vmem>>, vector<16x128xf32>
    %c0_14 = arith.constant 0 : index
    %c0_15 = arith.constant 0 : index
    %29 = vector.load %arg7[%c0_14, %c0_15] : memref<128x128xbf16, #tpu.memory_space<vmem>>, vector<128x128xbf16>
    %c0_16 = arith.constant 0 : index
    %c0_17 = arith.constant 0 : index
    %30 = vector.load %arg8[%c0_16, %c0_17] : memref<1x128xf32, #tpu.memory_space<vmem>>, vector<1x128xf32>
    %c0_18 = arith.constant 0 : index
    %c0_19 = arith.constant 0 : index
    %31 = vector.load %arg9[%c0_18, %c0_19] : memref<128x128xbf16, #tpu.memory_space<vmem>>, vector<128x128xbf16>
    %c0_20 = arith.constant 0 : index
    %c0_21 = arith.constant 0 : index
    %32 = vector.load %arg10[%c0_20, %c0_21] : memref<1x128xf32, #tpu.memory_space<vmem>>, vector<1x128xf32>
    %33 = arith.truncf %28 : vector<16x128xf32> to vector<16x128xbf16>
    %cst_22 = arith.constant dense<0.000000e+00> : vector<16x128xf32>
    %34 = tpu.matmul %33, %29, %cst_22 {dimension_numbers = #tpu.dot_dimension_numbers<[1], [0], [0], [1], [0, 0, 1, 1], [], []>} : vector<16x128xbf16>, vector<128x128xbf16>, vector<16x128xf32> -> vector<16x128xf32>
    %35 = vector.broadcast %30 : vector<1x128xf32> to vector<16x128xf32>
    %36 = arith.addf %34, %35 : vector<16x128xf32>
    %37 = vector.extract_strided_slice %22 {offsets = [0, 0], sizes = [16, 128], strides = [1, 1]} : vector<16x384xf32> to vector<16x128xf32>
    %38 = arith.mulf %37, %36 : vector<16x128xf32>
    %39 = vector.extract_strided_slice %27 {offsets = [0, 0], sizes = [16, 128], strides = [1, 1]} : vector<16x384xf32> to vector<16x128xf32>
    %40 = arith.addf %38, %39 : vector<16x128xf32>
    %41 = arith.truncf %40 : vector<16x128xf32> to vector<16x128xbf16>
    %cst_23 = arith.constant dense<0.000000e+00> : vector<16x128xf32>
    %42 = tpu.matmul %41, %31, %cst_23 {dimension_numbers = #tpu.dot_dimension_numbers<[1], [0], [0], [1], [0, 0, 1, 1], [], []>} : vector<16x128xbf16>, vector<128x128xbf16>, vector<16x128xf32> -> vector<16x128xf32>
    %43 = vector.broadcast %32 : vector<1x128xf32> to vector<16x128xf32>
    %44 = arith.addf %42, %43 : vector<16x128xf32>
    %cst_24 = arith.constant 0.000000e+00 : f32
    %45 = vector.broadcast %cst_24 : f32 to vector<16x128xf32>
    %46 = arith.maximumf %44, %45 : vector<16x128xf32>
    %c0_25 = arith.constant 0 : index
    %c0_26 = arith.constant 0 : index
    %47 = vector.load %arg11[%c0_25, %c0_26] : memref<128x128xbf16, #tpu.memory_space<vmem>>, vector<128x128xbf16>
    %c0_27 = arith.constant 0 : index
    %c0_28 = arith.constant 0 : index
    %48 = vector.load %arg12[%c0_27, %c0_28] : memref<1x128xf32, #tpu.memory_space<vmem>>, vector<1x128xf32>
    %c0_29 = arith.constant 0 : index
    %c0_30 = arith.constant 0 : index
    %49 = vector.load %arg13[%c0_29, %c0_30] : memref<128x128xbf16, #tpu.memory_space<vmem>>, vector<128x128xbf16>
    %c0_31 = arith.constant 0 : index
    %c0_32 = arith.constant 0 : index
    %50 = vector.load %arg14[%c0_31, %c0_32] : memref<1x128xf32, #tpu.memory_space<vmem>>, vector<1x128xf32>
    %51 = arith.truncf %46 : vector<16x128xf32> to vector<16x128xbf16>
    %cst_33 = arith.constant dense<0.000000e+00> : vector<16x128xf32>
    %52 = tpu.matmul %51, %47, %cst_33 {dimension_numbers = #tpu.dot_dimension_numbers<[1], [0], [0], [1], [0, 0, 1, 1], [], []>} : vector<16x128xbf16>, vector<128x128xbf16>, vector<16x128xf32> -> vector<16x128xf32>
    %53 = vector.broadcast %48 : vector<1x128xf32> to vector<16x128xf32>
    %54 = arith.addf %52, %53 : vector<16x128xf32>
    %55 = vector.extract_strided_slice %22 {offsets = [0, 128], sizes = [16, 128], strides = [1, 1]} : vector<16x384xf32> to vector<16x128xf32>
    %56 = arith.mulf %55, %54 : vector<16x128xf32>
    %57 = vector.extract_strided_slice %27 {offsets = [0, 128], sizes = [16, 128], strides = [1, 1]} : vector<16x384xf32> to vector<16x128xf32>
    %58 = arith.addf %56, %57 : vector<16x128xf32>
    %59 = arith.truncf %58 : vector<16x128xf32> to vector<16x128xbf16>
    %cst_34 = arith.constant dense<0.000000e+00> : vector<16x128xf32>
    %60 = tpu.matmul %59, %49, %cst_34 {dimension_numbers = #tpu.dot_dimension_numbers<[1], [0], [0], [1], [0, 0, 1, 1], [], []>} : vector<16x128xbf16>, vector<128x128xbf16>, vector<16x128xf32> -> vector<16x128xf32>
    %61 = vector.broadcast %50 : vector<1x128xf32> to vector<16x128xf32>
    %62 = arith.addf %60, %61 : vector<16x128xf32>
    %cst_35 = arith.constant 0.000000e+00 : f32
    %63 = vector.broadcast %cst_35 : f32 to vector<16x128xf32>
    %64 = arith.maximumf %62, %63 : vector<16x128xf32>
    %c0_36 = arith.constant 0 : index
    %c0_37 = arith.constant 0 : index
    %65 = vector.load %arg15[%c0_36, %c0_37] : memref<128x128xbf16, #tpu.memory_space<vmem>>, vector<128x128xbf16>
    %c0_38 = arith.constant 0 : index
    %c0_39 = arith.constant 0 : index
    %66 = vector.load %arg16[%c0_38, %c0_39] : memref<1x128xf32, #tpu.memory_space<vmem>>, vector<1x128xf32>
    %c0_40 = arith.constant 0 : index
    %c0_41 = arith.constant 0 : index
    %67 = vector.load %arg17[%c0_40, %c0_41] : memref<128x128xbf16, #tpu.memory_space<vmem>>, vector<128x128xbf16>
    %c0_42 = arith.constant 0 : index
    %c0_43 = arith.constant 0 : index
    %68 = vector.load %arg18[%c0_42, %c0_43] : memref<1x128xf32, #tpu.memory_space<vmem>>, vector<1x128xf32>
    %69 = arith.truncf %64 : vector<16x128xf32> to vector<16x128xbf16>
    %cst_44 = arith.constant dense<0.000000e+00> : vector<16x128xf32>
    %70 = tpu.matmul %69, %65, %cst_44 {dimension_numbers = #tpu.dot_dimension_numbers<[1], [0], [0], [1], [0, 0, 1, 1], [], []>} : vector<16x128xbf16>, vector<128x128xbf16>, vector<16x128xf32> -> vector<16x128xf32>
    %71 = vector.broadcast %66 : vector<1x128xf32> to vector<16x128xf32>
    %72 = arith.addf %70, %71 : vector<16x128xf32>
    %73 = vector.extract_strided_slice %22 {offsets = [0, 256], sizes = [16, 128], strides = [1, 1]} : vector<16x384xf32> to vector<16x128xf32>
    %74 = arith.mulf %73, %72 : vector<16x128xf32>
    %75 = vector.extract_strided_slice %27 {offsets = [0, 256], sizes = [16, 128], strides = [1, 1]} : vector<16x384xf32> to vector<16x128xf32>
    %76 = arith.addf %74, %75 : vector<16x128xf32>
    %77 = arith.truncf %76 : vector<16x128xf32> to vector<16x128xbf16>
    %cst_45 = arith.constant dense<0.000000e+00> : vector<16x128xf32>
    %78 = tpu.matmul %77, %67, %cst_45 {dimension_numbers = #tpu.dot_dimension_numbers<[1], [0], [0], [1], [0, 0, 1, 1], [], []>} : vector<16x128xbf16>, vector<128x128xbf16>, vector<16x128xf32> -> vector<16x128xf32>
    %79 = vector.broadcast %68 : vector<1x128xf32> to vector<16x128xf32>
    %80 = arith.addf %78, %79 : vector<16x128xf32>
    %cst_46 = arith.constant 0.000000e+00 : f32
    %81 = vector.broadcast %cst_46 : f32 to vector<16x128xf32>
    %82 = arith.maximumf %80, %81 : vector<16x128xf32>
    %83 = arith.truncf %82 : vector<16x128xf32> to vector<16x128xbf16>
    %c0_47 = arith.constant 0 : index
    %c0_48 = arith.constant 0 : index
    %84 = vector.load %arg19[%c0_47, %c0_48] : memref<128x128xbf16, #tpu.memory_space<vmem>>, vector<128x128xbf16>
    %cst_49 = arith.constant dense<0.000000e+00> : vector<16x128xf32>
    %85 = tpu.matmul %83, %84, %cst_49 {dimension_numbers = #tpu.dot_dimension_numbers<[1], [0], [0], [1], [0, 0, 1, 1], [], []>} : vector<16x128xbf16>, vector<128x128xbf16>, vector<16x128xf32> -> vector<16x128xf32>
    %c0_50 = arith.constant 0 : index
    %c0_51 = arith.constant 0 : index
    %86 = vector.load %arg20[%c0_50, %c0_51] : memref<1x128xf32, #tpu.memory_space<vmem>>, vector<1x128xf32>
    %87 = vector.broadcast %86 : vector<1x128xf32> to vector<16x128xf32>
    %88 = arith.addf %85, %87 : vector<16x128xf32>
    %c0_52 = arith.constant 0 : index
    %c0_53 = arith.constant 0 : index
    %89 = vector.load %arg21[%c0_52, %c0_53] : memref<16x128xf32, #tpu.memory_space<vmem>>, vector<16x128xf32>
    tpu.vector_store %arg21[%c0_52, %c0_53], %88 {strides = array<i32>} : memref<16x128xf32, #tpu.memory_space<vmem>>, vector<16x128xf32>,
    return
  }
  func.func @transform_0(%arg0: i32) -> (i32, i32) {
    %c0_i32 = arith.constant 0 : i32
    %c0_i32_0 = arith.constant 0 : i32
    return %arg0, %c0_i32 : i32, i32
  }
  func.func @transform_1(%arg0: i32) -> (i32, i32) {
    %c0_i32 = arith.constant 0 : i32
    %c0_i32_0 = arith.constant 0 : i32
    return %arg0, %c0_i32 : i32, i32
  }
  func.func @transform_2(%arg0: i32) -> (i32, i32) {
    %c0_i32 = arith.constant 0 : i32
    %c0_i32_0 = arith.constant 0 : i32
    %c0_i32_1 = arith.constant 0 : i32
    return %c0_i32, %c0_i32_0 : i32, i32
  }
  func.func @transform_3(%arg0: i32) -> (i32, i32) {
    %c0_i32 = arith.constant 0 : i32
    %c0_i32_0 = arith.constant 0 : i32
    %c0_i32_1 = arith.constant 0 : i32
    return %c0_i32, %c0_i32_0 : i32, i32
  }
  func.func @transform_4(%arg0: i32) -> (i32, i32) {
    %c0_i32 = arith.constant 0 : i32
    %c0_i32_0 = arith.constant 0 : i32
    %c0_i32_1 = arith.constant 0 : i32
    return %c0_i32, %c0_i32_0 : i32, i32
  }
  func.func @transform_5(%arg0: i32) -> (i32, i32) {
    %c0_i32 = arith.constant 0 : i32
    %c0_i32_0 = arith.constant 0 : i32
    %c0_i32_1 = arith.constant 0 : i32
    return %c0_i32, %c0_i32_0 : i32, i32
  }
  func.func @transform_6(%arg0: i32) -> (i32, i32) {
    %c0_i32 = arith.constant 0 : i32
    %c0_i32_0 = arith.constant 0 : i32
    %c0_i32_1 = arith.constant 0 : i32
    return %c0_i32, %c0_i32_0 : i32, i32
  }
  func.func @transform_7(%arg0: i32) -> (i32, i32) {
    %c0_i32 = arith.constant 0 : i32
    %c0_i32_0 = arith.constant 0 : i32
    %c0_i32_1 = arith.constant 0 : i32
    return %c0_i32, %c0_i32_0 : i32, i32
  }
  func.func @transform_8(%arg0: i32) -> (i32, i32) {
    %c0_i32 = arith.constant 0 : i32
    %c0_i32_0 = arith.constant 0 : i32
    %c0_i32_1 = arith.constant 0 : i32
    return %c0_i32, %c0_i32_0 : i32, i32
  }
  func.func @transform_9(%arg0: i32) -> (i32, i32) {
    %c0_i32 = arith.constant 0 : i32
    %c0_i32_0 = arith.constant 0 : i32
    %c0_i32_1 = arith.constant 0 : i32
    return %c0_i32, %c0_i32_0 : i32, i32
  }
  func.func @transform_10(%arg0: i32) -> (i32, i32) {
    %c0_i32 = arith.constant 0 : i32
    %c0_i32_0 = arith.constant 0 : i32
    %c0_i32_1 = arith.constant 0 : i32
    return %c0_i32, %c0_i32_0 : i32, i32
  }
  func.func @transform_11(%arg0: i32) -> (i32, i32) {
    %c0_i32 = arith.constant 0 : i32
    %c0_i32_0 = arith.constant 0 : i32
    %c0_i32_1 = arith.constant 0 : i32
    return %c0_i32, %c0_i32_0 : i32, i32
  }
  func.func @transform_12(%arg0: i32) -> (i32, i32) {
    %c0_i32 = arith.constant 0 : i32
    %c0_i32_0 = arith.constant 0 : i32
    %c0_i32_1 = arith.constant 0 : i32
    return %c0_i32, %c0_i32_0 : i32, i32
  }
  func.func @transform_13(%arg0: i32) -> (i32, i32) {
    %c0_i32 = arith.constant 0 : i32
    %c0_i32_0 = arith.constant 0 : i32
    %c0_i32_1 = arith.constant 0 : i32
    return %c0_i32, %c0_i32_0 : i32, i32
  }
  func.func @transform_14(%arg0: i32) -> (i32, i32) {
    %c0_i32 = arith.constant 0 : i32
    %c0_i32_0 = arith.constant 0 : i32
    %c0_i32_1 = arith.constant 0 : i32
    return %c0_i32, %c0_i32_0 : i32, i32
  }
  func.func @transform_15(%arg0: i32) -> (i32, i32) {
    %c0_i32 = arith.constant 0 : i32
    %c0_i32_0 = arith.constant 0 : i32
    %c0_i32_1 = arith.constant 0 : i32
    return %c0_i32, %c0_i32_0 : i32, i32
  }
  func.func @transform_16(%arg0: i32) -> (i32, i32) {
    %c0_i32 = arith.constant 0 : i32
    %c0_i32_0 = arith.constant 0 : i32
    %c0_i32_1 = arith.constant 0 : i32
    return %c0_i32, %c0_i32_0 : i32, i32
  }
  func.func @transform_17(%arg0: i32) -> (i32, i32) {
    %c0_i32 = arith.constant 0 : i32
    %c0_i32_0 = arith.constant 0 : i32
    %c0_i32_1 = arith.constant 0 : i32
    return %c0_i32, %c0_i32_0 : i32, i32
  }
  func.func @transform_18(%arg0: i32) -> (i32, i32) {
    %c0_i32 = arith.constant 0 : i32
    %c0_i32_0 = arith.constant 0 : i32
    %c0_i32_1 = arith.constant 0 : i32
    return %c0_i32, %c0_i32_0 : i32, i32
  }
  func.func @transform_19(%arg0: i32) -> (i32, i32) {
    %c0_i32 = arith.constant 0 : i32
    %c0_i32_0 = arith.constant 0 : i32
    %c0_i32_1 = arith.constant 0 : i32
    return %c0_i32, %c0_i32_0 : i32, i32
  }
  func.func @transform_20(%arg0: i32) -> (i32, i32) {
    %c0_i32 = arith.constant 0 : i32
    %c0_i32_0 = arith.constant 0 : i32
    return %arg0, %c0_i32 : i32, i32
  }
}

</mosaic_0001>

<llo_original>
// kernel: tpu_custom_call.1
$region0: #{tpu_custom_call.1}
  #allocation0 [shape = 'u32[]', space=smem, size = 0x4, offset = 0x4, fixed_abs, tag = 'smem constant byte address 0x4 - core index']
  #allocation1 [shape = 'u32[72,128]{1,0:T(1,128)}', space=vmem, size = 0x9000, scoped, tag = 'internal scratch']
  %s0 = inlined_call_operand.hbm [shape: f32[16,128], index: 0, kind: input, shape index: {}]
  %s1 = inlined_call_operand.hbm [shape: f32[16,64], index: 1, kind: input, shape index: {}]
  %s2 = inlined_call_operand.hbm [shape: bf16[64,384], index: 2, kind: input, shape index: {}]
  %s3 = inlined_call_operand.hbm [shape: f32[1,384], index: 3, kind: input, shape index: {}]
  %s4 = inlined_call_operand.hbm [shape: bf16[64,384], index: 4, kind: input, shape index: {}]
  %s5 = inlined_call_operand.vmem [shape: f32[1,384], index: 5, kind: input, shape index: {}]
  %s6 = inlined_call_operand.hbm [shape: bf16[128,128], index: 6, kind: input, shape index: {}]
  %s7 = inlined_call_operand.vmem [shape: f32[1,128], index: 7, kind: input, shape index: {}]
  %s8 = inlined_call_operand.hbm [shape: bf16[128,128], index: 8, kind: input, shape index: {}]
  %s9 = inlined_call_operand.vmem [shape: f32[1,128], index: 9, kind: input, shape index: {}]
  %s10 = inlined_call_operand.hbm [shape: bf16[128,128], index: 10, kind: input, shape index: {}]
  %s11 = inlined_call_operand.vmem [shape: f32[1,128], index: 11, kind: input, shape index: {}]
  %s12 = inlined_call_operand.hbm [shape: bf16[128,128], index: 12, kind: input, shape index: {}]
  %s13 = inlined_call_operand.vmem [shape: f32[1,128], index: 13, kind: input, shape index: {}]
  %s14 = inlined_call_operand.hbm [shape: bf16[128,128], index: 14, kind: input, shape index: {}]
  %s15 = inlined_call_operand.vmem [shape: f32[1,128], index: 15, kind: input, shape index: {}]
  %s16 = inlined_call_operand.hbm [shape: bf16[128,128], index: 16, kind: input, shape index: {}]
  %s17 = inlined_call_operand.vmem [shape: f32[1,128], index: 17, kind: input, shape index: {}]
  %s18 = inlined_call_operand.hbm [shape: bf16[128,128], index: 18, kind: input, shape index: {}]
  %s19 = inlined_call_operand.vmem [shape: f32[1,128], index: 19, kind: input, shape index: {}]
  %s20 = inlined_call_operand.hbm [shape: f32[16,128], index: 20, kind: output, shape index: {}]
  %s21 = sld [smem:[#allocation0]]
  $region138: #{tpu_custom_call.1} parent=0
    _
  %s23 = ssub.s32 1, %s21
  %s24 = scalar_select 0, %s23, %s21
  $region1: #{tpu_custom_call.1} parent=0
    #allocation2 [shape = 'u8[8192]{0}', space=vmem, size = 0x2000, scoped, tag = 'input window, operand 0, single buffered']
    #allocation3 [shape = 's32[1]{0}', space=sflag, size = 0x4, scoped, tag = 'scoped memory for tpu_custom_call.1']
    #allocation4 [shape = 's32[1]{0}', space=sflag, size = 0x4, scoped, tag = 'scoped memory for tpu_custom_call.1']
    #allocation5 [shape = 'u8[8192]{0}', space=vmem, size = 0x2000, scoped, tag = 'input window, operand 1, single buffered']
    #allocation6 [shape = 's32[1]{0}', space=sflag, size = 0x4, scoped, tag = 'scoped memory for tpu_custom_call.1']
    #allocation7 [shape = 'u8[49152]{0}', space=vmem, size = 0xc000, scoped, tag = 'input window, operand 2, single buffered']
    #allocation8 [shape = 'u8[1536]{0}', space=vmem, size = 0x800, scoped, tag = 'input window, operand 3, single buffered']
    #allocation9 [shape = 's32[1]{0}', space=sflag, size = 0x4, scoped, tag = 'scoped memory for tpu_custom_call.1']
    #allocation10 [shape = 'u8[49152]{0}', space=vmem, size = 0xc000, scoped, tag = 'input window, operand 4, single buffered']
    #allocation11 [shape = 'u8[32768]{0}', space=vmem, size = 0x8000, scoped, tag = 'input window, operand 6, single buffered']
    #allocation12 [shape = 's32[1]{0}', space=sflag, size = 0x4, scoped, tag = 'scoped memory for tpu_custom_call.1']
    #allocation13 [shape = 'u8[32768]{0}', space=vmem, size = 0x8000, scoped, tag = 'input window, operand 8, single buffered']
    #allocation14 [shape = 'u8[32768]{0}', space=vmem, size = 0x8000, scoped, tag = 'input window, operand 10, single buffered']
    #allocation15 [shape = 's32[1]{0}', space=sflag, size = 0x4, scoped, tag = 'scoped memory for tpu_custom_call.1']
    #allocation16 [shape = 'u8[32768]{0}', space=vmem, size = 0x8000, scoped, tag = 'input window, operand 12, single buffered']
    #allocation17 [shape = 'u8[32768]{0}', space=vmem, size = 0x8000, scoped, tag = 'input window, operand 14, single buffered']
    #allocation18 [shape = 's32[1]{0}', space=sflag, size = 0x4, scoped, tag = 'scoped memory for tpu_custom_call.1']
    #allocation19 [shape = 'u8[32768]{0}', space=vmem, size = 0x8000, scoped, tag = 'input window, operand 16, single buffered']
    #allocation20 [shape = 'u8[32768]{0}', space=vmem, size = 0x8000, scoped, tag = 'input window, operand 18, single buffered']
    #allocation21 [shape = 's32[1]{0}', space=sflag, size = 0x4, scoped, tag = 'scoped memory for tpu_custom_call.1']
    #allocation22 [shape = 'u8[8192]{0}', space=vmem, size = 0x2000, scoped, tag = 'output window, operand 0, single buffered']
    %25 = vsyncpa [#allocation3], 0
    %26 = vsyncpa [#allocation6], 0
    %27 = vsyncpa [#allocation9], 0
    %28 = vsyncpa [#allocation12], 0
    %29 = vsyncpa [#allocation15], 0
    %30 = vsyncpa [#allocation18], 0
    %31 = vsyncpa [#allocation21], 0
    %32 = vsyncpa [#allocation4], 0
    // Predicated region
    $region2: #{tpu_custom_call.1} parent=1 // pred_check
      _
    $region3: #{tpu_custom_call.1} parent=1 // pred_check_branch
      %34 = sbr.rel (0) target = $region5
    $region4: #{tpu_custom_call.1} parent=1 // pred_region
      %36 = vsyncadd [#allocation3], 0
      %s37 = sshll.u32 %s0, 4
      %s38 = int_to_ptr.hbm [resolvable:$true] %s37
      %s39 = sshll.u32 [#allocation2], 4
      %s40 = int_to_ptr.vmem [resolvable:$true] %s39
      %45 = dma.hbm_to_vmem [thread:$0]  %s38, 256, %s40, [#allocation3], 128, 128, 8
    $region5: #{tpu_custom_call.1} parent=1 // pred_fallthru
      _
    // Predicated region
    $region6: #{tpu_custom_call.1} parent=1 // pred_check
      _
    $region7: #{tpu_custom_call.1} parent=1 // pred_check_branch
      %47 = sbr.rel (0) target = $region9
    $region8: #{tpu_custom_call.1} parent=1 // pred_region
      %49 = vsyncadd [#allocation6], 0
      %s50 = sshll.u32 %s1, 4
      %s51 = int_to_ptr.hbm [resolvable:$true] %s50
      %s52 = sshll.u32 [#allocation5], 4
      %s53 = int_to_ptr.vmem [resolvable:$true] %s52
      %58 = dma.hbm_to_vmem [thread:$0]  %s51, 256, %s53, [#allocation6], 128, 128, 8
    $region9: #{tpu_custom_call.1} parent=1 // pred_fallthru
      _
    // Predicated region
    $region10: #{tpu_custom_call.1} parent=1 // pred_check
      _
    $region11: #{tpu_custom_call.1} parent=1 // pred_check_branch
      %60 = sbr.rel (0) target = $region13
    $region12: #{tpu_custom_call.1} parent=1 // pred_region
      %62 = vsyncadd [#allocation6], 0
      %s63 = sshll.u32 %s2, 4
      %s64 = int_to_ptr.hbm [resolvable:$true] %s63
      %s65 = sshll.u32 [#allocation7], 4
      %s66 = int_to_ptr.vmem [resolvable:$true] %s65
      %71 = dma.hbm_to_vmem [thread:$0]  %s64, 1536, %s66, [#allocation6], 192, 192, 12
    $region13: #{tpu_custom_call.1} parent=1 // pred_fallthru
      _
    // Predicated region
    $region14: #{tpu_custom_call.1} parent=1 // pred_check
      _
    $region15: #{tpu_custom_call.1} parent=1 // pred_check_branch
      %73 = sbr.rel (0) target = $region17
    $region16: #{tpu_custom_call.1} parent=1 // pred_region
      %75 = vsyncadd [#allocation9], 0
      %s77 = sshll.u32 %s3, 4
      %s78 = int_to_ptr.hbm [resolvable:$true] %s77
      %s79 = sshll.u32 [#allocation8], 4
      %s80 = int_to_ptr.vmem [resolvable:$true] %s79
      %82 = dma.hbm_to_vmem [thread:$0]  %s78, 48, %s80, [#allocation9]
    $region17: #{tpu_custom_call.1} parent=1 // pred_fallthru
      _
    // Predicated region
    $region18: #{tpu_custom_call.1} parent=1 // pred_check
      _
    $region19: #{tpu_custom_call.1} parent=1 // pred_check_branch
      %84 = sbr.rel (0) target = $region21
    $region20: #{tpu_custom_call.1} parent=1 // pred_region
      %86 = vsyncadd [#allocation9], 0
      %s87 = sshll.u32 %s4, 4
      %s88 = int_to_ptr.hbm [resolvable:$true] %s87
      %s89 = sshll.u32 [#allocation10], 4
      %s90 = int_to_ptr.vmem [resolvable:$true] %s89
      %95 = dma.hbm_to_vmem [thread:$0]  %s88, 1536, %s90, [#allocation9], 192, 192, 12
    $region21: #{tpu_custom_call.1} parent=1 // pred_fallthru
      _
    // Predicated region
    $region22: #{tpu_custom_call.1} parent=1 // pred_check
      _
    $region23: #{tpu_custom_call.1} parent=1 // pred_check_branch
      %97 = sbr.rel (0) target = $region25
    $region24: #{tpu_custom_call.1} parent=1 // pred_region
      _
    $region25: #{tpu_custom_call.1} parent=1 // pred_fallthru
      _
    // Predicated region
    $region26: #{tpu_custom_call.1} parent=1 // pred_check
      _
    $region27: #{tpu_custom_call.1} parent=1 // pred_check_branch
      %99 = sbr.rel (0) target = $region29
    $region28: #{tpu_custom_call.1} parent=1 // pred_region
      %101 = vsyncadd [#allocation12], 0
      %s102 = sshll.u32 %s6, 4
      %s103 = int_to_ptr.hbm [resolvable:$true] %s102
      %s104 = sshll.u32 [#allocation11], 4
      %s105 = int_to_ptr.vmem [resolvable:$true] %s104
      %110 = dma.hbm_to_vmem [thread:$0]  %s103, 1024, %s105, [#allocation12], 64, 64, 4
    $region29: #{tpu_custom_call.1} parent=1 // pred_fallthru
      _
    // Predicated region
    $region30: #{tpu_custom_call.1} parent=1 // pred_check
      _
    $region31: #{tpu_custom_call.1} parent=1 // pred_check_branch
      %112 = sbr.rel (0) target = $region33
    $region32: #{tpu_custom_call.1} parent=1 // pred_region
      _
    $region33: #{tpu_custom_call.1} parent=1 // pred_fallthru
      _
    // Predicated region
    $region34: #{tpu_custom_call.1} parent=1 // pred_check
      _
    $region35: #{tpu_custom_call.1} parent=1 // pred_check_branch
      %114 = sbr.rel (0) target = $region37
    $region36: #{tpu_custom_call.1} parent=1 // pred_region
      %116 = vsyncadd [#allocation12], 0
      %s117 = sshll.u32 %s8, 4
      %s118 = int_to_ptr.hbm [resolvable:$true] %s117
      %s119 = sshll.u32 [#allocation13], 4
      %s120 = int_to_ptr.vmem [resolvable:$true] %s119
      %125 = dma.hbm_to_vmem [thread:$0]  %s118, 1024, %s120, [#allocation12], 64, 64, 4
    $region37: #{tpu_custom_call.1} parent=1 // pred_fallthru
      _
    // Predicated region
    $region38: #{tpu_custom_call.1} parent=1 // pred_check
      _
    $region39: #{tpu_custom_call.1} parent=1 // pred_check_branch
      %127 = sbr.rel (0) target = $region41
    $region40: #{tpu_custom_call.1} parent=1 // pred_region
      _
    $region41: #{tpu_custom_call.1} parent=1 // pred_fallthru
      _
    // Predicated region
    $region42: #{tpu_custom_call.1} parent=1 // pred_check
      _
    $region43: #{tpu_custom_call.1} parent=1 // pred_check_branch
      %129 = sbr.rel (0) target = $region45
    $region44: #{tpu_custom_call.1} parent=1 // pred_region
      %131 = vsyncadd [#allocation15], 0
      %s132 = sshll.u32 %s10, 4
      %s133 = int_to_ptr.hbm [resolvable:$true] %s132
      %s134 = sshll.u32 [#allocation14], 4
      %s135 = int_to_ptr.vmem [resolvable:$true] %s134
      %140 = dma.hbm_to_vmem [thread:$0]  %s133, 1024, %s135, [#allocation15], 64, 64, 4
    $region45: #{tpu_custom_call.1} parent=1 // pred_fallthru
      _
    // Predicated region
    $region46: #{tpu_custom_call.1} parent=1 // pred_check
      _
    $region47: #{tpu_custom_call.1} parent=1 // pred_check_branch
      %142 = sbr.rel (0) target = $region49
    $region48: #{tpu_custom_call.1} parent=1 // pred_region
      _
    $region49: #{tpu_custom_call.1} parent=1 // pred_fallthru
      _
    // Predicated region
    $region50: #{tpu_custom_call.1} parent=1 // pred_check
      _
    $region51: #{tpu_custom_call.1} parent=1 // pred_check_branch
      %144 = sbr.rel (0) target = $region53
    $region52: #{tpu_custom_call.1} parent=1 // pred_region
      %146 = vsyncadd [#allocation15], 0
      %s147 = sshll.u32 %s12, 4
      %s148 = int_to_ptr.hbm [resolvable:$true] %s147
      %s149 = sshll.u32 [#allocation16], 4
      %s150 = int_to_ptr.vmem [resolvable:$true] %s149
      %155 = dma.hbm_to_vmem [thread:$0]  %s148, 1024, %s150, [#allocation15], 64, 64, 4
    $region53: #{tpu_custom_call.1} parent=1 // pred_fallthru
      _
    // Predicated region
    $region54: #{tpu_custom_call.1} parent=1 // pred_check
      _
    $region55: #{tpu_custom_call.1} parent=1 // pred_check_branch
      %157 = sbr.rel (0) target = $region57
    $region56: #{tpu_custom_call.1} parent=1 // pred_region
      _
    $region57: #{tpu_custom_call.1} parent=1 // pred_fallthru
      _
    // Predicated region
    $region58: #{tpu_custom_call.1} parent=1 // pred_check
      _
    $region59: #{tpu_custom_call.1} parent=1 // pred_check_branch
      %159 = sbr.rel (0) target = $region61
    $region60: #{tpu_custom_call.1} parent=1 // pred_region
      %161 = vsyncadd [#allocation18], 0
      %s162 = sshll.u32 %s14, 4
      %s163 = int_to_ptr.hbm [resolvable:$true] %s162
      %s164 = sshll.u32 [#allocation17], 4
      %s165 = int_to_ptr.vmem [resolvable:$true] %s164
      %170 = dma.hbm_to_vmem [thread:$0]  %s163, 1024, %s165, [#allocation18], 64, 64, 4
    $region61: #{tpu_custom_call.1} parent=1 // pred_fallthru
      _
    // Predicated region
    $region62: #{tpu_custom_call.1} parent=1 // pred_check
      _
    $region63: #{tpu_custom_call.1} parent=1 // pred_check_branch
      %172 = sbr.rel (0) target = $region65
    $region64: #{tpu_custom_call.1} parent=1 // pred_region
      _
    $region65: #{tpu_custom_call.1} parent=1 // pred_fallthru
      _
    // Predicated region
    $region66: #{tpu_custom_call.1} parent=1 // pred_check
      _
    $region67: #{tpu_custom_call.1} parent=1 // pred_check_branch
      %174 = sbr.rel (0) target = $region69
    $region68: #{tpu_custom_call.1} parent=1 // pred_region
      %176 = vsyncadd [#allocation18], 0
      %s177 = sshll.u32 %s16, 4
      %s178 = int_to_ptr.hbm [resolvable:$true] %s177
      %s179 = sshll.u32 [#allocation19], 4
      %s180 = int_to_ptr.vmem [resolvable:$true] %s179
      %185 = dma.hbm_to_vmem [thread:$0]  %s178, 1024, %s180, [#allocation18], 64, 64, 4
    $region69: #{tpu_custom_call.1} parent=1 // pred_fallthru
      _
    // Predicated region
    $region70: #{tpu_custom_call.1} parent=1 // pred_check
      _
    $region71: #{tpu_custom_call.1} parent=1 // pred_check_branch
      %187 = sbr.rel (0) target = $region73
    $region72: #{tpu_custom_call.1} parent=1 // pred_region
      _
    $region73: #{tpu_custom_call.1} parent=1 // pred_fallthru
      _
    // Predicated region
    $region74: #{tpu_custom_call.1} parent=1 // pred_check
      _
    $region75: #{tpu_custom_call.1} parent=1 // pred_check_branch
      %189 = sbr.rel (0) target = $region77
    $region76: #{tpu_custom_call.1} parent=1 // pred_region
      %191 = vsyncadd [#allocation21], 0
      %s192 = sshll.u32 %s18, 4
      %s193 = int_to_ptr.hbm [resolvable:$true] %s192
      %s194 = sshll.u32 [#allocation20], 4
      %s195 = int_to_ptr.vmem [resolvable:$true] %s194
      %200 = dma.hbm_to_vmem [thread:$0]  %s193, 1024, %s195, [#allocation21], 64, 64, 4
    $region77: #{tpu_custom_call.1} parent=1 // pred_fallthru
      _
    // Predicated region
    $region78: #{tpu_custom_call.1} parent=1 // pred_check
      _
    $region79: #{tpu_custom_call.1} parent=1 // pred_check_branch
      %202 = sbr.rel (0) target = $region81
    $region80: #{tpu_custom_call.1} parent=1 // pred_region
      _
    $region81: #{tpu_custom_call.1} parent=1 // pred_fallthru
      _
    // Predicated region
    $region82: #{tpu_custom_call.1} parent=1 // pred_check
      _
    $region83: #{tpu_custom_call.1} parent=1 // pred_check_branch
      %204 = sbr.rel (0) target = $region85
    $region84: #{tpu_custom_call.1} parent=1 // pred_region
      %206 = dma.done [#allocation3], 256
    $region85: #{tpu_custom_call.1} parent=1 // pred_fallthru
      _
    // Predicated region
    $region86: #{tpu_custom_call.1} parent=1 // pred_check
      _
    $region87: #{tpu_custom_call.1} parent=1 // pred_check_branch
      %208 = sbr.rel (0) target = $region89
    $region88: #{tpu_custom_call.1} parent=1 // pred_region
      %210 = dma.done [#allocation6], 256
    $region89: #{tpu_custom_call.1} parent=1 // pred_fallthru
      _
    // Predicated region
    $region90: #{tpu_custom_call.1} parent=1 // pred_check
      _
    $region91: #{tpu_custom_call.1} parent=1 // pred_check_branch
      %212 = sbr.rel (0) target = $region93
    $region92: #{tpu_custom_call.1} parent=1 // pred_region
      %214 = dma.done [#allocation6], 1536
    $region93: #{tpu_custom_call.1} parent=1 // pred_fallthru
      _
    // Predicated region
    $region94: #{tpu_custom_call.1} parent=1 // pred_check
      _
    $region95: #{tpu_custom_call.1} parent=1 // pred_check_branch
      %216 = sbr.rel (0) target = $region97
    $region96: #{tpu_custom_call.1} parent=1 // pred_region
      %218 = dma.done [#allocation9], 48
    $region97: #{tpu_custom_call.1} parent=1 // pred_fallthru
      _
    // Predicated region
    $region98: #{tpu_custom_call.1} parent=1 // pred_check
      _
    $region99: #{tpu_custom_call.1} parent=1 // pred_check_branch
      %220 = sbr.rel (0) target = $region101
    $region100: #{tpu_custom_call.1} parent=1 // pred_region
      %222 = dma.done [#allocation9], 1536
    $region101: #{tpu_custom_call.1} parent=1 // pred_fallthru
      _
    // Predicated region
    $region102: #{tpu_custom_call.1} parent=1 // pred_check
      _
    $region103: #{tpu_custom_call.1} parent=1 // pred_check_branch
      %224 = sbr.rel (0) target = $region105
    $region104: #{tpu_custom_call.1} parent=1 // pred_region
      %226 = dma.done [#allocation12], 1024
    $region105: #{tpu_custom_call.1} parent=1 // pred_fallthru
      _
    // Predicated region
    $region106: #{tpu_custom_call.1} parent=1 // pred_check
      _
    $region107: #{tpu_custom_call.1} parent=1 // pred_check_branch
      %228 = sbr.rel (0) target = $region109
    $region108: #{tpu_custom_call.1} parent=1 // pred_region
      %230 = dma.done [#allocation12], 1024
    $region109: #{tpu_custom_call.1} parent=1 // pred_fallthru
      _
    // Predicated region
    $region110: #{tpu_custom_call.1} parent=1 // pred_check
      _
    $region111: #{tpu_custom_call.1} parent=1 // pred_check_branch
      %232 = sbr.rel (0) target = $region113
    $region112: #{tpu_custom_call.1} parent=1 // pred_region
      %234 = dma.done [#allocation15], 1024
    $region113: #{tpu_custom_call.1} parent=1 // pred_fallthru
      _
    // Predicated region
    $region114: #{tpu_custom_call.1} parent=1 // pred_check
      _
    $region115: #{tpu_custom_call.1} parent=1 // pred_check_branch
      %236 = sbr.rel (0) target = $region117
    $region116: #{tpu_custom_call.1} parent=1 // pred_region
      %238 = dma.done [#allocation15], 1024
    $region117: #{tpu_custom_call.1} parent=1 // pred_fallthru
      _
    // Predicated region
    $region118: #{tpu_custom_call.1} parent=1 // pred_check
      _
    $region119: #{tpu_custom_call.1} parent=1 // pred_check_branch
      %240 = sbr.rel (0) target = $region121
    $region120: #{tpu_custom_call.1} parent=1 // pred_region
      %242 = dma.done [#allocation18], 1024
    $region121: #{tpu_custom_call.1} parent=1 // pred_fallthru
      _
    // Predicated region
    $region122: #{tpu_custom_call.1} parent=1 // pred_check
      _
    $region123: #{tpu_custom_call.1} parent=1 // pred_check_branch
      %244 = sbr.rel (0) target = $region125
    $region124: #{tpu_custom_call.1} parent=1 // pred_region
      %246 = dma.done [#allocation18], 1024
    $region125: #{tpu_custom_call.1} parent=1 // pred_fallthru
      _
    // Predicated region
    $region126: #{tpu_custom_call.1} parent=1 // pred_check
      _
    $region127: #{tpu_custom_call.1} parent=1 // pred_check_branch
      %248 = sbr.rel (0) target = $region129
    $region128: #{tpu_custom_call.1} parent=1 // pred_region
      %250 = dma.done [#allocation21], 1024
    $region129: #{tpu_custom_call.1} parent=1 // pred_fallthru
      _
    %v252 = vld [vmem:[#allocation5] sm:$0xff]
    %v253 = vld [vmem:[#allocation5 + $0x8] sm:$0xff]
    %v254 = vmax.f32 %v252, 0.0
    %v255 = vmax.f32 %v253, 0.0
    %vm256 = vcmp.ne.f32.partialorder %v252, %v252
    %vm257 = vcmp.ne.f32.partialorder %v253, %v253
    %v258 = vadd.f32 %v252, 0.0
    %v259 = vadd.f32 %v253, 0.0
    %v260 = vand.u32 2147483647, %v252
    %v261 = vand.u32 2147483647, %v253
    %v262 = vsub.f32 0.0, %v260
    %v263 = vsub.f32 0.0, %v261
    %v264 = vmul.f32 %v262, 1.442695
    %v265 = vpow.pop %v264
    %v266 = vmul.f32 %v263, 1.442695
    %v267 = vpow.pop %v266
    %v268 = vadd.f32 %v265, 1.0
    %v269 = vlog2.pop %v268
    %v270 = vmul.f32 %v269, 0.6931472
    %v271 = vmul.f32 -0.5, %v265
    %v272 = vadd.f32 %v271, 1.0
    %v273 = vmul.f32 %v272, %v265
    %v274 = vand.u32 2147483647, %v265
    %vm275 = vcmp.lt.f32.partialorder %v274, 0.0004427343
    %v276 = vsel %vm275, %v273, %v270
    %v277 = vadd.f32 %v267, 1.0
    %v278 = vlog2.pop %v277
    %v279 = vmul.f32 %v278, 0.6931472
    %v280 = vmul.f32 -0.5, %v267
    %v281 = vadd.f32 %v280, 1.0
    %v282 = vmul.f32 %v281, %v267
    %v283 = vand.u32 2147483647, %v267
    %vm284 = vcmp.lt.f32.partialorder %v283, 0.0004427343
    %v285 = vsel %vm284, %v282, %v279
    %v286 = vadd.f32 %v254, %v276
    %v287 = vadd.f32 %v255, %v285
    %v288 = vsel %vm256, %v258, %v286
    %v289 = vsel %vm257, %v259, %v287
    %v290 = vtanh.pop %v288
    %v291 = vtanh.pop %v289
    %v292 = vmul.f32 %v252, %v290
    %v293 = vmul.f32 %v253, %v291
    %v294 = vpack.c.bf16 %v293, %v292
    %v295 = vld [vmem:[#allocation7] sm:$0xff]
    %v296 = vld [vmem:[#allocation7 + $0x8] sm:$0xf]
    %v297 = vld [vmem:[#allocation7 + $0xc] sm:$0xff]
    %v298 = vld [vmem:[#allocation7 + $0x14] sm:$0xf]
    %v299 = vld [vmem:[#allocation7 + $0x18] sm:$0xff]
    %v300 = vld [vmem:[#allocation7 + $0x20] sm:$0xf]
    %v301 = vld [vmem:[#allocation7 + $0x24] sm:$0xff]
    %v302 = vld [vmem:[#allocation7 + $0x2c] sm:$0xf]
    %v303 = vld [vmem:[#allocation7 + $0x30] sm:$0xff]
    %v304 = vld [vmem:[#allocation7 + $0x38] sm:$0xf]
    %v305 = vld [vmem:[#allocation7 + $0x3c] sm:$0xff]
    %v306 = vld [vmem:[#allocation7 + $0x44] sm:$0xf]
    %v307 = vld [vmem:[#allocation7 + $0x48] sm:$0xff]
    %v308 = vld [vmem:[#allocation7 + $0x50] sm:$0xf]
    %v309 = vld [vmem:[#allocation7 + $0x54] sm:$0xff]
    %v310 = vld [vmem:[#allocation7 + $0x5c] sm:$0xf]
    %v311 = vld [vmem:[#allocation8] sm:$0x7]
    %v313 = vperm.slane %v311, 0
    %v314 = vperm.slane %v311, 1
    %v315 = vperm.slane %v311, 2
    %v335 = vunpack.c.l.b16 %v295
    %v336 = vunpack.c.h.b16 %v295
    %v337 = vunpack.c.l.b16 %v296
    %v338 = vunpack.c.l.b16 %v297
    %v339 = vunpack.c.h.b16 %v297
    %v340 = vunpack.c.l.b16 %v298
    %v341 = vunpack.c.l.b16 %v299
    %v342 = vunpack.c.h.b16 %v299
    %v343 = vunpack.c.l.b16 %v300
    %v344 = vunpack.c.l.b16 %v301
    %v345 = vunpack.c.h.b16 %v301
    %v346 = vunpack.c.l.b16 %v302
    %v347 = vunpack.c.l.b16 %v303
    %v348 = vunpack.c.h.b16 %v303
    %v349 = vunpack.c.l.b16 %v304
    %v350 = vunpack.c.l.b16 %v305
    %v351 = vunpack.c.h.b16 %v305
    %v352 = vunpack.c.l.b16 %v306
    %v353 = vunpack.c.l.b16 %v307
    %v354 = vunpack.c.h.b16 %v307
    %v355 = vunpack.c.l.b16 %v308
    %v356 = vunpack.c.l.b16 %v309
    %v357 = vunpack.c.h.b16 %v309
    %v358 = vunpack.c.l.b16 %v310
    %v359 = vpack.c.b16 %v338, %v335
    %v360 = vpack.c.b16 %v339, %v336
    %v361 = vpack.c.b16 %v340, %v337
    %v362 = vpack.c.b16 %v344, %v341
    %v363 = vpack.c.b16 %v345, %v342
    %v364 = vpack.c.b16 %v346, %v343
    %v365 = vpack.c.b16 %v350, %v347
    %v366 = vpack.c.b16 %v351, %v348
    %v367 = vpack.c.b16 %v352, %v349
    %v368 = vpack.c.b16 %v356, %v353
    %v369 = vpack.c.b16 %v357, %v354
    %v370 = vpack.c.b16 %v358, %v355
    %vm383 = vcmask 523264
    %v385 = vsel %vm383, %v294, 0
    %387 = vmatpush.bf16.msra.mxu0 0
    %388 = vmatpush.bf16.msra.mxu0 0
    %389 = vmatpush.bf16.msra.mxu0 0
    %390 = vmatpush.bf16.msra.mxu0 0
    %391 = vmatpush.bf16.msra.mxu0 %v368
    %392 = vmatpush.bf16.msra.mxu0 %v365
    %393 = vmatpush.bf16.msra.mxu0 %v362
    %394 = vmatpush.bf16.msra.mxu0 %v359
    %395 = vmatmul.bf16.gmra.mxu0 %v385
    %v396 = vpop.f32.mrf.mxu0
    %v397 = vadd.f32 %v313, %v396
    %v398 = vpop.f32.mrf.mxu0
    %v399 = vadd.f32 %v313, %v398
    %400 = vdwg.mxu0
    %401 = vmatpush.bf16.msra.mxu0 0
    %402 = vmatpush.bf16.msra.mxu0 0
    %403 = vmatpush.bf16.msra.mxu0 0
    %404 = vmatpush.bf16.msra.mxu0 0
    %405 = vmatpush.bf16.msra.mxu0 %v369
    %406 = vmatpush.bf16.msra.mxu0 %v366
    %407 = vmatpush.bf16.msra.mxu0 %v363
    %408 = vmatpush.bf16.msra.mxu0 %v360
    %409 = vmatmul.bf16.gmra.mxu0 %v385
    %v410 = vpop.f32.mrf.mxu0
    %v411 = vadd.f32 %v314, %v410
    %v412 = vpop.f32.mrf.mxu0
    %v413 = vadd.f32 %v314, %v412
    %414 = vdwg.mxu0
    %415 = vmatpush.bf16.msra.mxu0 0
    %416 = vmatpush.bf16.msra.mxu0 0
    %417 = vmatpush.bf16.msra.mxu0 0
    %418 = vmatpush.bf16.msra.mxu0 0
    %419 = vmatpush.bf16.msra.mxu0 %v370
    %420 = vmatpush.bf16.msra.mxu0 %v367
    %421 = vmatpush.bf16.msra.mxu0 %v364
    %422 = vmatpush.bf16.msra.mxu0 %v361
    %423 = vmatmul.bf16.gmra.mxu0 %v385
    %v424 = vpop.f32.mrf.mxu0
    %v425 = vadd.f32 %v315, %v424
    %v426 = vpop.f32.mrf.mxu0
    %v427 = vadd.f32 %v315, %v426
    %428 = vdwg.mxu0
    %v429 = vld [vmem:[#allocation10] sm:$0xff]
    %v430 = vld [vmem:[#allocation10 + $0x8] sm:$0xf]
    %v431 = vld [vmem:[#allocation10 + $0xc] sm:$0xff]
    %v432 = vld [vmem:[#allocation10 + $0x14] sm:$0xf]
    %v433 = vld [vmem:[#allocation10 + $0x18] sm:$0xff]
    %v434 = vld [vmem:[#allocation10 + $0x20] sm:$0xf]
    %v435 = vld [vmem:[#allocation10 + $0x24] sm:$0xff]
    %v436 = vld [vmem:[#allocation10 + $0x2c] sm:$0xf]
    %v437 = vld [vmem:[#allocation10 + $0x30] sm:$0xff]
    %v438 = vld [vmem:[#allocation10 + $0x38] sm:$0xf]
    %v439 = vld [vmem:[#allocation10 + $0x3c] sm:$0xff]
    %v440 = vld [vmem:[#allocation10 + $0x44] sm:$0xf]
    %v441 = vld [vmem:[#allocation10 + $0x48] sm:$0xff]
    %v442 = vld [vmem:[#allocation10 + $0x50] sm:$0xf]
    %v443 = vld [vmem:[#allocation10 + $0x54] sm:$0xff]
    %v444 = vld [vmem:[#allocation10 + $0x5c] sm:$0xf]
    %v445 = vld [vmem:[%s5] sm:$0x7]
    %v447 = vperm.slane %v445, 0
    %v448 = vperm.slane %v445, 1
    %v449 = vperm.slane %v445, 2
    %v469 = vunpack.c.l.b16 %v429
    %v470 = vunpack.c.h.b16 %v429
    %v471 = vunpack.c.l.b16 %v430
    %v472 = vunpack.c.l.b16 %v431
    %v473 = vunpack.c.h.b16 %v431
    %v474 = vunpack.c.l.b16 %v432
    %v475 = vunpack.c.l.b16 %v433
    %v476 = vunpack.c.h.b16 %v433
    %v477 = vunpack.c.l.b16 %v434
    %v478 = vunpack.c.l.b16 %v435
    %v479 = vunpack.c.h.b16 %v435
    %v480 = vunpack.c.l.b16 %v436
    %v481 = vunpack.c.l.b16 %v437
    %v482 = vunpack.c.h.b16 %v437
    %v483 = vunpack.c.l.b16 %v438
    %v484 = vunpack.c.l.b16 %v439
    %v485 = vunpack.c.h.b16 %v439
    %v486 = vunpack.c.l.b16 %v440
    %v487 = vunpack.c.l.b16 %v441
    %v488 = vunpack.c.h.b16 %v441
    %v489 = vunpack.c.l.b16 %v442
    %v490 = vunpack.c.l.b16 %v443
    %v491 = vunpack.c.h.b16 %v443
    %v492 = vunpack.c.l.b16 %v444
    %v493 = vpack.c.b16 %v472, %v469
    %v494 = vpack.c.b16 %v473, %v470
    %v495 = vpack.c.b16 %v474, %v471
    %v496 = vpack.c.b16 %v478, %v475
    %v497 = vpack.c.b16 %v479, %v476
    %v498 = vpack.c.b16 %v480, %v477
    %v499 = vpack.c.b16 %v484, %v481
    %v500 = vpack.c.b16 %v485, %v482
    %v501 = vpack.c.b16 %v486, %v483
    %v502 = vpack.c.b16 %v490, %v487
    %v503 = vpack.c.b16 %v491, %v488
    %v504 = vpack.c.b16 %v492, %v489
    %517 = vmatpush.bf16.msra.mxu0 0
    %518 = vmatpush.bf16.msra.mxu0 0
    %519 = vmatpush.bf16.msra.mxu0 0
    %520 = vmatpush.bf16.msra.mxu0 0
    %521 = vmatpush.bf16.msra.mxu0 %v502
    %522 = vmatpush.bf16.msra.mxu0 %v499
    %523 = vmatpush.bf16.msra.mxu0 %v496
    %524 = vmatpush.bf16.msra.mxu0 %v493
    %525 = vmatmul.bf16.gmra.mxu0 %v385
    %v526 = vpop.f32.mrf.mxu0
    %v527 = vadd.f32 %v447, %v526
    %v528 = vpop.f32.mrf.mxu0
    %v529 = vadd.f32 %v447, %v528
    %530 = vdwg.mxu0
    %531 = vmatpush.bf16.msra.mxu0 0
    %532 = vmatpush.bf16.msra.mxu0 0
    %533 = vmatpush.bf16.msra.mxu0 0
    %534 = vmatpush.bf16.msra.mxu0 0
    %535 = vmatpush.bf16.msra.mxu0 %v503
    %536 = vmatpush.bf16.msra.mxu0 %v500
    %537 = vmatpush.bf16.msra.mxu0 %v497
    %538 = vmatpush.bf16.msra.mxu0 %v494
    %539 = vmatmul.bf16.gmra.mxu0 %v385
    %v540 = vpop.f32.mrf.mxu0
    %v541 = vadd.f32 %v448, %v540
    %v542 = vpop.f32.mrf.mxu0
    %v543 = vadd.f32 %v448, %v542
    %544 = vdwg.mxu0
    %545 = vmatpush.bf16.msra.mxu0 0
    %546 = vmatpush.bf16.msra.mxu0 0
    %547 = vmatpush.bf16.msra.mxu0 0
    %548 = vmatpush.bf16.msra.mxu0 0
    %549 = vmatpush.bf16.msra.mxu0 %v504
    %550 = vmatpush.bf16.msra.mxu0 %v501
    %551 = vmatpush.bf16.msra.mxu0 %v498
    %552 = vmatpush.bf16.msra.mxu0 %v495
    %553 = vmatmul.bf16.gmra.mxu0 %v385
    %v554 = vpop.f32.mrf.mxu0
    %v555 = vadd.f32 %v449, %v554
    %v556 = vpop.f32.mrf.mxu0
    %v557 = vadd.f32 %v449, %v556
    %558 = vdwg.mxu0
    %v559 = vld [vmem:[#allocation2] sm:$0xff]
    %v560 = vld [vmem:[#allocation2 + $0x8] sm:$0xff]
    %v561 = vld [vmem:[#allocation11] sm:$0xf]
    %v562 = vld [vmem:[#allocation11 + $0x4] sm:$0xf]
    %v563 = vld [vmem:[#allocation11 + $0x8] sm:$0xf]
    %v564 = vld [vmem:[#allocation11 + $0xc] sm:$0xf]
    %v565 = vld [vmem:[#allocation11 + $0x10] sm:$0xf]
    %v566 = vld [vmem:[#allocation11 + $0x14] sm:$0xf]
    %v567 = vld [vmem:[#allocation11 + $0x18] sm:$0xf]
    %v568 = vld [vmem:[#allocation11 + $0x1c] sm:$0xf]
    %v569 = vld [vmem:[#allocation11 + $0x20] sm:$0xf]
    %v570 = vld [vmem:[#allocation11 + $0x24] sm:$0xf]
    %v571 = vld [vmem:[#allocation11 + $0x28] sm:$0xf]
    %v572 = vld [vmem:[#allocation11 + $0x2c] sm:$0xf]
    %v573 = vld [vmem:[#allocation11 + $0x30] sm:$0xf]
    %v574 = vld [vmem:[#allocation11 + $0x34] sm:$0xf]
    %v575 = vld [vmem:[#allocation11 + $0x38] sm:$0xf]
    %v576 = vld [vmem:[#allocation11 + $0x3c] sm:$0xf]
    %v577 = vld [vmem:[%s7] sm:$0x1]
    %v578 = vld [vmem:[#allocation13] sm:$0xf]
    %v579 = vld [vmem:[#allocation13 + $0x4] sm:$0xf]
    %v580 = vld [vmem:[#allocation13 + $0x8] sm:$0xf]
    %v581 = vld [vmem:[#allocation13 + $0xc] sm:$0xf]
    %v582 = vld [vmem:[#allocation13 + $0x10] sm:$0xf]
    %v583 = vld [vmem:[#allocation13 + $0x14] sm:$0xf]
    %v584 = vld [vmem:[#allocation13 + $0x18] sm:$0xf]
    %v585 = vld [vmem:[#allocation13 + $0x1c] sm:$0xf]
    %v586 = vld [vmem:[#allocation13 + $0x20] sm:$0xf]
    %v587 = vld [vmem:[#allocation13 + $0x24] sm:$0xf]
    %v588 = vld [vmem:[#allocation13 + $0x28] sm:$0xf]
    %v589 = vld [vmem:[#allocation13 + $0x2c] sm:$0xf]
    %v590 = vld [vmem:[#allocation13 + $0x30] sm:$0xf]
    %v591 = vld [vmem:[#allocation13 + $0x34] sm:$0xf]
    %v592 = vld [vmem:[#allocation13 + $0x38] sm:$0xf]
    %v593 = vld [vmem:[#allocation13 + $0x3c] sm:$0xf]
    %v594 = vld [vmem:[%s9] sm:$0x1]
    %v595 = vpack.c.bf16 %v560, %v559
    %v597 = vperm.slane %v577, 0
    %v615 = vunpack.c.l.b16 %v561
    %v616 = vunpack.c.l.b16 %v562
    %v617 = vunpack.c.l.b16 %v563
    %v618 = vunpack.c.l.b16 %v564
    %v619 = vunpack.c.l.b16 %v565
    %v620 = vunpack.c.l.b16 %v566
    %v621 = vunpack.c.l.b16 %v567
    %v622 = vunpack.c.l.b16 %v568
    %v623 = vunpack.c.l.b16 %v569
    %v624 = vunpack.c.l.b16 %v570
    %v625 = vunpack.c.l.b16 %v571
    %v626 = vunpack.c.l.b16 %v572
    %v627 = vunpack.c.l.b16 %v573
    %v628 = vunpack.c.l.b16 %v574
    %v629 = vunpack.c.l.b16 %v575
    %v630 = vunpack.c.l.b16 %v576
    %v631 = vpack.c.b16 %v616, %v615
    %v632 = vpack.c.b16 %v618, %v617
    %v633 = vpack.c.b16 %v620, %v619
    %v634 = vpack.c.b16 %v622, %v621
    %v635 = vpack.c.b16 %v624, %v623
    %v636 = vpack.c.b16 %v626, %v625
    %v637 = vpack.c.b16 %v628, %v627
    %v638 = vpack.c.b16 %v630, %v629
    %647 = vmatpush.bf16.msra.mxu0 %v638
    %648 = vmatpush.bf16.msra.mxu0 %v637
    %649 = vmatpush.bf16.msra.mxu0 %v636
    %650 = vmatpush.bf16.msra.mxu0 %v635
    %651 = vmatpush.bf16.msra.mxu0 %v634
    %652 = vmatpush.bf16.msra.mxu0 %v633
    %653 = vmatpush.bf16.msra.mxu0 %v632
    %654 = vmatpush.bf16.msra.mxu0 %v631
    %655 = vmatmul.bf16.gmra.mxu0 %v595
    %v656 = vpop.f32.mrf.mxu0
    %v657 = vadd.f32 %v597, %v656
    %v658 = vpop.f32.mrf.mxu0
    %v659 = vadd.f32 %v597, %v658
    %660 = vdwg.mxu0
    %v661 = vmul.f32 %v397, %v657
    %v662 = vmul.f32 %v399, %v659
    %v663 = vadd.f32 %v661, %v527
    %v664 = vadd.f32 %v662, %v529
    %v665 = vpack.c.bf16 %v664, %v663
    %v667 = vperm.slane %v594, 0
    %v685 = vunpack.c.l.b16 %v578
    %v686 = vunpack.c.l.b16 %v579
    %v687 = vunpack.c.l.b16 %v580
    %v688 = vunpack.c.l.b16 %v581
    %v689 = vunpack.c.l.b16 %v582
    %v690 = vunpack.c.l.b16 %v583
    %v691 = vunpack.c.l.b16 %v584
    %v692 = vunpack.c.l.b16 %v585
    %v693 = vunpack.c.l.b16 %v586
    %v694 = vunpack.c.l.b16 %v587
    %v695 = vunpack.c.l.b16 %v588
    %v696 = vunpack.c.l.b16 %v589
    %v697 = vunpack.c.l.b16 %v590
    %v698 = vunpack.c.l.b16 %v591
    %v699 = vunpack.c.l.b16 %v592
    %v700 = vunpack.c.l.b16 %v593
    %v701 = vpack.c.b16 %v686, %v685
    %v702 = vpack.c.b16 %v688, %v687
    %v703 = vpack.c.b16 %v690, %v689
    %v704 = vpack.c.b16 %v692, %v691
    %v705 = vpack.c.b16 %v694, %v693
    %v706 = vpack.c.b16 %v696, %v695
    %v707 = vpack.c.b16 %v698, %v697
    %v708 = vpack.c.b16 %v700, %v699
    %717 = vmatpush.bf16.msra.mxu0 %v708
    %718 = vmatpush.bf16.msra.mxu0 %v707
    %719 = vmatpush.bf16.msra.mxu0 %v706
    %720 = vmatpush.bf16.msra.mxu0 %v705
    %721 = vmatpush.bf16.msra.mxu0 %v704
    %722 = vmatpush.bf16.msra.mxu0 %v703
    %723 = vmatpush.bf16.msra.mxu0 %v702
    %724 = vmatpush.bf16.msra.mxu0 %v701
    %725 = vmatmul.bf16.gmra.mxu0 %v665
    %v726 = vpop.f32.mrf.mxu0
    %v727 = vadd.f32 %v667, %v726
    %v728 = vpop.f32.mrf.mxu0
    %v729 = vadd.f32 %v667, %v728
    %730 = vdwg.mxu0
    %v731 = vmax.f32 %v727, 0.0
    %v732 = vmax.f32 %v729, 0.0
    %v733 = vld [vmem:[#allocation14] sm:$0xf]
    %v734 = vld [vmem:[#allocation14 + $0x4] sm:$0xf]
    %v735 = vld [vmem:[#allocation14 + $0x8] sm:$0xf]
    %v736 = vld [vmem:[#allocation14 + $0xc] sm:$0xf]
    %v737 = vld [vmem:[#allocation14 + $0x10] sm:$0xf]
    %v738 = vld [vmem:[#allocation14 + $0x14] sm:$0xf]
    %v739 = vld [vmem:[#allocation14 + $0x18] sm:$0xf]
    %v740 = vld [vmem:[#allocation14 + $0x1c] sm:$0xf]
    %v741 = vld [vmem:[#allocation14 + $0x20] sm:$0xf]
    %v742 = vld [vmem:[#allocation14 + $0x24] sm:$0xf]
    %v743 = vld [vmem:[#allocation14 + $0x28] sm:$0xf]
    %v744 = vld [vmem:[#allocation14 + $0x2c] sm:$0xf]
    %v745 = vld [vmem:[#allocation14 + $0x30] sm:$0xf]
    %v746 = vld [vmem:[#allocation14 + $0x34] sm:$0xf]
    %v747 = vld [vmem:[#allocation14 + $0x38] sm:$0xf]
    %v748 = vld [vmem:[#allocation14 + $0x3c] sm:$0xf]
    %v749 = vld [vmem:[%s11] sm:$0x1]
    %v750 = vld [vmem:[#allocation16] sm:$0xf]
    %v751 = vld [vmem:[#allocation16 + $0x4] sm:$0xf]
    %v752 = vld [vmem:[#allocation16 + $0x8] sm:$0xf]
    %v753 = vld [vmem:[#allocation16 + $0xc] sm:$0xf]
    %v754 = vld [vmem:[#allocation16 + $0x10] sm:$0xf]
    %v755 = vld [vmem:[#allocation16 + $0x14] sm:$0xf]
    %v756 = vld [vmem:[#allocation16 + $0x18] sm:$0xf]
    %v757 = vld [vmem:[#allocation16 + $0x1c] sm:$0xf]
    %v758 = vld [vmem:[#allocation16 + $0x20] sm:$0xf]
    %v759 = vld [vmem:[#allocation16 + $0x24] sm:$0xf]
    %v760 = vld [vmem:[#allocation16 + $0x28] sm:$0xf]
    %v761 = vld [vmem:[#allocation16 + $0x2c] sm:$0xf]
    %v762 = vld [vmem:[#allocation16 + $0x30] sm:$0xf]
    %v763 = vld [vmem:[#allocation16 + $0x34] sm:$0xf]
    %v764 = vld [vmem:[#allocation16 + $0x38] sm:$0xf]
    %v765 = vld [vmem:[#allocation16 + $0x3c] sm:$0xf]
    %v766 = vld [vmem:[%s13] sm:$0x1]
    %v767 = vpack.c.bf16 %v732, %v731
    %v769 = vperm.slane %v749, 0
    %v787 = vunpack.c.l.b16 %v733
    %v788 = vunpack.c.l.b16 %v734
    %v789 = vunpack.c.l.b16 %v735
    %v790 = vunpack.c.l.b16 %v736
    %v791 = vunpack.c.l.b16 %v737
    %v792 = vunpack.c.l.b16 %v738
    %v793 = vunpack.c.l.b16 %v739
    %v794 = vunpack.c.l.b16 %v740
    %v795 = vunpack.c.l.b16 %v741
    %v796 = vunpack.c.l.b16 %v742
    %v797 = vunpack.c.l.b16 %v743
    %v798 = vunpack.c.l.b16 %v744
    %v799 = vunpack.c.l.b16 %v745
    %v800 = vunpack.c.l.b16 %v746
    %v801 = vunpack.c.l.b16 %v747
    %v802 = vunpack.c.l.b16 %v748
    %v803 = vpack.c.b16 %v788, %v787
    %v804 = vpack.c.b16 %v790, %v789
    %v805 = vpack.c.b16 %v792, %v791
    %v806 = vpack.c.b16 %v794, %v793
    %v807 = vpack.c.b16 %v796, %v795
    %v808 = vpack.c.b16 %v798, %v797
    %v809 = vpack.c.b16 %v800, %v799
    %v810 = vpack.c.b16 %v802, %v801
    %819 = vmatpush.bf16.msra.mxu0 %v810
    %820 = vmatpush.bf16.msra.mxu0 %v809
    %821 = vmatpush.bf16.msra.mxu0 %v808
    %822 = vmatpush.bf16.msra.mxu0 %v807
    %823 = vmatpush.bf16.msra.mxu0 %v806
    %824 = vmatpush.bf16.msra.mxu0 %v805
    %825 = vmatpush.bf16.msra.mxu0 %v804
    %826 = vmatpush.bf16.msra.mxu0 %v803
    %827 = vmatmul.bf16.gmra.mxu0 %v767
    %v828 = vpop.f32.mrf.mxu0
    %v829 = vadd.f32 %v769, %v828
    %v830 = vpop.f32.mrf.mxu0
    %v831 = vadd.f32 %v769, %v830
    %832 = vdwg.mxu0
    %v833 = vmul.f32 %v411, %v829
    %v834 = vmul.f32 %v413, %v831
    %v835 = vadd.f32 %v833, %v541
    %v836 = vadd.f32 %v834, %v543
    %v837 = vpack.c.bf16 %v836, %v835
    %v839 = vperm.slane %v766, 0
    %v857 = vunpack.c.l.b16 %v750
    %v858 = vunpack.c.l.b16 %v751
    %v859 = vunpack.c.l.b16 %v752
    %v860 = vunpack.c.l.b16 %v753
    %v861 = vunpack.c.l.b16 %v754
    %v862 = vunpack.c.l.b16 %v755
    %v863 = vunpack.c.l.b16 %v756
    %v864 = vunpack.c.l.b16 %v757
    %v865 = vunpack.c.l.b16 %v758
    %v866 = vunpack.c.l.b16 %v759
    %v867 = vunpack.c.l.b16 %v760
    %v868 = vunpack.c.l.b16 %v761
    %v869 = vunpack.c.l.b16 %v762
    %v870 = vunpack.c.l.b16 %v763
    %v871 = vunpack.c.l.b16 %v764
    %v872 = vunpack.c.l.b16 %v765
    %v873 = vpack.c.b16 %v858, %v857
    %v874 = vpack.c.b16 %v860, %v859
    %v875 = vpack.c.b16 %v862, %v861
    %v876 = vpack.c.b16 %v864, %v863
    %v877 = vpack.c.b16 %v866, %v865
    %v878 = vpack.c.b16 %v868, %v867
    %v879 = vpack.c.b16 %v870, %v869
    %v880 = vpack.c.b16 %v872, %v871
    %889 = vmatpush.bf16.msra.mxu0 %v880
    %890 = vmatpush.bf16.msra.mxu0 %v879
    %891 = vmatpush.bf16.msra.mxu0 %v878
    %892 = vmatpush.bf16.msra.mxu0 %v877
    %893 = vmatpush.bf16.msra.mxu0 %v876
    %894 = vmatpush.bf16.msra.mxu0 %v875
    %895 = vmatpush.bf16.msra.mxu0 %v874
    %896 = vmatpush.bf16.msra.mxu0 %v873
    %897 = vmatmul.bf16.gmra.mxu0 %v837
    %v898 = vpop.f32.mrf.mxu0
    %v899 = vadd.f32 %v839, %v898
    %v900 = vpop.f32.mrf.mxu0
    %v901 = vadd.f32 %v839, %v900
    %902 = vdwg.mxu0
    %v903 = vmax.f32 %v899, 0.0
    %v904 = vmax.f32 %v901, 0.0
    %v905 = vld [vmem:[#allocation17] sm:$0xf]
    %v906 = vld [vmem:[#allocation17 + $0x4] sm:$0xf]
    %v907 = vld [vmem:[#allocation17 + $0x8] sm:$0xf]
    %v908 = vld [vmem:[#allocation17 + $0xc] sm:$0xf]
    %v909 = vld [vmem:[#allocation17 + $0x10] sm:$0xf]
    %v910 = vld [vmem:[#allocation17 + $0x14] sm:$0xf]
    %v911 = vld [vmem:[#allocation17 + $0x18] sm:$0xf]
    %v912 = vld [vmem:[#allocation17 + $0x1c] sm:$0xf]
    %v913 = vld [vmem:[#allocation17 + $0x20] sm:$0xf]
    %v914 = vld [vmem:[#allocation17 + $0x24] sm:$0xf]
    %v915 = vld [vmem:[#allocation17 + $0x28] sm:$0xf]
    %v916 = vld [vmem:[#allocation17 + $0x2c] sm:$0xf]
    %v917 = vld [vmem:[#allocation17 + $0x30] sm:$0xf]
    %v918 = vld [vmem:[#allocation17 + $0x34] sm:$0xf]
    %v919 = vld [vmem:[#allocation17 + $0x38] sm:$0xf]
    %v920 = vld [vmem:[#allocation17 + $0x3c] sm:$0xf]
    %v921 = vld [vmem:[%s15] sm:$0x1]
    %v922 = vld [vmem:[#allocation19] sm:$0xf]
    %v923 = vld [vmem:[#allocation19 + $0x4] sm:$0xf]
    %v924 = vld [vmem:[#allocation19 + $0x8] sm:$0xf]
    %v925 = vld [vmem:[#allocation19 + $0xc] sm:$0xf]
    %v926 = vld [vmem:[#allocation19 + $0x10] sm:$0xf]
    %v927 = vld [vmem:[#allocation19 + $0x14] sm:$0xf]
    %v928 = vld [vmem:[#allocation19 + $0x18] sm:$0xf]
    %v929 = vld [vmem:[#allocation19 + $0x1c] sm:$0xf]
    %v930 = vld [vmem:[#allocation19 + $0x20] sm:$0xf]
    %v931 = vld [vmem:[#allocation19 + $0x24] sm:$0xf]
    %v932 = vld [vmem:[#allocation19 + $0x28] sm:$0xf]
    %v933 = vld [vmem:[#allocation19 + $0x2c] sm:$0xf]
    %v934 = vld [vmem:[#allocation19 + $0x30] sm:$0xf]
    %v935 = vld [vmem:[#allocation19 + $0x34] sm:$0xf]
    %v936 = vld [vmem:[#allocation19 + $0x38] sm:$0xf]
    %v937 = vld [vmem:[#allocation19 + $0x3c] sm:$0xf]
    %v938 = vld [vmem:[%s17] sm:$0x1]
    %v939 = vpack.c.bf16 %v904, %v903
    %v941 = vperm.slane %v921, 0
    %v959 = vunpack.c.l.b16 %v905
    %v960 = vunpack.c.l.b16 %v906
    %v961 = vunpack.c.l.b16 %v907
    %v962 = vunpack.c.l.b16 %v908
    %v963 = vunpack.c.l.b16 %v909
    %v964 = vunpack.c.l.b16 %v910
    %v965 = vunpack.c.l.b16 %v911
    %v966 = vunpack.c.l.b16 %v912
    %v967 = vunpack.c.l.b16 %v913
    %v968 = vunpack.c.l.b16 %v914
    %v969 = vunpack.c.l.b16 %v915
    %v970 = vunpack.c.l.b16 %v916
    %v971 = vunpack.c.l.b16 %v917
    %v972 = vunpack.c.l.b16 %v918
    %v973 = vunpack.c.l.b16 %v919
    %v974 = vunpack.c.l.b16 %v920
    %v975 = vpack.c.b16 %v960, %v959
    %v976 = vpack.c.b16 %v962, %v961
    %v977 = vpack.c.b16 %v964, %v963
    %v978 = vpack.c.b16 %v966, %v965
    %v979 = vpack.c.b16 %v968, %v967
    %v980 = vpack.c.b16 %v970, %v969
    %v981 = vpack.c.b16 %v972, %v971
    %v982 = vpack.c.b16 %v974, %v973
    %991 = vmatpush.bf16.msra.mxu0 %v982
    %992 = vmatpush.bf16.msra.mxu0 %v981
    %993 = vmatpush.bf16.msra.mxu0 %v980
    %994 = vmatpush.bf16.msra.mxu0 %v979
    %995 = vmatpush.bf16.msra.mxu0 %v978
    %996 = vmatpush.bf16.msra.mxu0 %v977
    %997 = vmatpush.bf16.msra.mxu0 %v976
    %998 = vmatpush.bf16.msra.mxu0 %v975
    %999 = vmatmul.bf16.gmra.mxu0 %v939
    %v1000 = vpop.f32.mrf.mxu0
    %v1001 = vadd.f32 %v941, %v1000
    %v1002 = vpop.f32.mrf.mxu0
    %v1003 = vadd.f32 %v941, %v1002
    %1004 = vdwg.mxu0
    %v1005 = vmul.f32 %v425, %v1001
    %v1006 = vmul.f32 %v427, %v1003
    %v1007 = vadd.f32 %v1005, %v555
    %v1008 = vadd.f32 %v1006, %v557
    %v1009 = vpack.c.bf16 %v1008, %v1007
    %v1011 = vperm.slane %v938, 0
    %v1029 = vunpack.c.l.b16 %v922
    %v1030 = vunpack.c.l.b16 %v923
    %v1031 = vunpack.c.l.b16 %v924
    %v1032 = vunpack.c.l.b16 %v925
    %v1033 = vunpack.c.l.b16 %v926
    %v1034 = vunpack.c.l.b16 %v927
    %v1035 = vunpack.c.l.b16 %v928
    %v1036 = vunpack.c.l.b16 %v929
    %v1037 = vunpack.c.l.b16 %v930
    %v1038 = vunpack.c.l.b16 %v931
    %v1039 = vunpack.c.l.b16 %v932
    %v1040 = vunpack.c.l.b16 %v933
    %v1041 = vunpack.c.l.b16 %v934
    %v1042 = vunpack.c.l.b16 %v935
    %v1043 = vunpack.c.l.b16 %v936
    %v1044 = vunpack.c.l.b16 %v937
    %v1045 = vpack.c.b16 %v1030, %v1029
    %v1046 = vpack.c.b16 %v1032, %v1031
    %v1047 = vpack.c.b16 %v1034, %v1033
    %v1048 = vpack.c.b16 %v1036, %v1035
    %v1049 = vpack.c.b16 %v1038, %v1037
    %v1050 = vpack.c.b16 %v1040, %v1039
    %v1051 = vpack.c.b16 %v1042, %v1041
    %v1052 = vpack.c.b16 %v1044, %v1043
    %1061 = vmatpush.bf16.msra.mxu0 %v1052
    %1062 = vmatpush.bf16.msra.mxu0 %v1051
    %1063 = vmatpush.bf16.msra.mxu0 %v1050
    %1064 = vmatpush.bf16.msra.mxu0 %v1049
    %1065 = vmatpush.bf16.msra.mxu0 %v1048
    %1066 = vmatpush.bf16.msra.mxu0 %v1047
    %1067 = vmatpush.bf16.msra.mxu0 %v1046
    %1068 = vmatpush.bf16.msra.mxu0 %v1045
    %1069 = vmatmul.bf16.gmra.mxu0 %v1009
    %v1070 = vpop.f32.mrf.mxu0
    %v1071 = vadd.f32 %v1011, %v1070
    %v1072 = vpop.f32.mrf.mxu0
    %v1073 = vadd.f32 %v1011, %v1072
    %1074 = vdwg.mxu0
    %v1075 = vmax.f32 %v1071, 0.0
    %v1076 = vmax.f32 %v1073, 0.0
    %v1077 = vpack.c.bf16 %v1076, %v1075
    %v1078 = vld [vmem:[#allocation20] sm:$0xf]
    %v1079 = vld [vmem:[#allocation20 + $0x4] sm:$0xf]
    %v1080 = vld [vmem:[#allocation20 + $0x8] sm:$0xf]
    %v1081 = vld [vmem:[#allocation20 + $0xc] sm:$0xf]
    %v1082 = vld [vmem:[#allocation20 + $0x10] sm:$0xf]
    %v1083 = vld [vmem:[#allocation20 + $0x14] sm:$0xf]
    %v1084 = vld [vmem:[#allocation20 + $0x18] sm:$0xf]
    %v1085 = vld [vmem:[#allocation20 + $0x1c] sm:$0xf]
    %v1086 = vld [vmem:[#allocation20 + $0x20] sm:$0xf]
    %v1087 = vld [vmem:[#allocation20 + $0x24] sm:$0xf]
    %v1088 = vld [vmem:[#allocation20 + $0x28] sm:$0xf]
    %v1089 = vld [vmem:[#allocation20 + $0x2c] sm:$0xf]
    %v1090 = vld [vmem:[#allocation20 + $0x30] sm:$0xf]
    %v1091 = vld [vmem:[#allocation20 + $0x34] sm:$0xf]
    %v1092 = vld [vmem:[#allocation20 + $0x38] sm:$0xf]
    %v1093 = vld [vmem:[#allocation20 + $0x3c] sm:$0xf]
    %v1094 = vld [vmem:[%s19] sm:$0x1]
    %v1096 = vperm.slane %v1094, 0
    %v1114 = vunpack.c.l.b16 %v1078
    %v1115 = vunpack.c.l.b16 %v1079
    %v1116 = vunpack.c.l.b16 %v1080
    %v1117 = vunpack.c.l.b16 %v1081
    %v1118 = vunpack.c.l.b16 %v1082
    %v1119 = vunpack.c.l.b16 %v1083
    %v1120 = vunpack.c.l.b16 %v1084
    %v1121 = vunpack.c.l.b16 %v1085
    %v1122 = vunpack.c.l.b16 %v1086
    %v1123 = vunpack.c.l.b16 %v1087
    %v1124 = vunpack.c.l.b16 %v1088
    %v1125 = vunpack.c.l.b16 %v1089
    %v1126 = vunpack.c.l.b16 %v1090
    %v1127 = vunpack.c.l.b16 %v1091
    %v1128 = vunpack.c.l.b16 %v1092
    %v1129 = vunpack.c.l.b16 %v1093
    %v1130 = vpack.c.b16 %v1115, %v1114
    %v1131 = vpack.c.b16 %v1117, %v1116
    %v1132 = vpack.c.b16 %v1119, %v1118
    %v1133 = vpack.c.b16 %v1121, %v1120
    %v1134 = vpack.c.b16 %v1123, %v1122
    %v1135 = vpack.c.b16 %v1125, %v1124
    %v1136 = vpack.c.b16 %v1127, %v1126
    %v1137 = vpack.c.b16 %v1129, %v1128
    %1146 = vmatpush.bf16.msra.mxu0 %v1137
    %1147 = vmatpush.bf16.msra.mxu0 %v1136
    %1148 = vmatpush.bf16.msra.mxu0 %v1135
    %1149 = vmatpush.bf16.msra.mxu0 %v1134
    %1150 = vmatpush.bf16.msra.mxu0 %v1133
    %1151 = vmatpush.bf16.msra.mxu0 %v1132
    %1152 = vmatpush.bf16.msra.mxu0 %v1131
    %1153 = vmatpush.bf16.msra.mxu0 %v1130
    %1154 = vmatmul.bf16.gmra.mxu0 %v1077
    %v1155 = vpop.f32.mrf.mxu0
    %v1156 = vadd.f32 %v1096, %v1155
    %v1157 = vpop.f32.mrf.mxu0
    %v1158 = vadd.f32 %v1096, %v1157
    %1159 = vdwg.mxu0
    %1160 = vst [vmem:[#allocation22] sm:$0xff] %v1156
    %1161 = vst [vmem:[#allocation22 + $0x8] sm:$0xff] %v1158
    // Predicated region
    $region130: #{tpu_custom_call.1} parent=1 // pred_check
      _
    $region131: #{tpu_custom_call.1} parent=1 // pred_check_branch
      %1163 = sbr.rel (0) target = $region133
    $region132: #{tpu_custom_call.1} parent=1 // pred_region
      %1165 = vsyncadd [#allocation4], 0
      %s1166 = sshll.u32 [#allocation22], 4
      %s1167 = int_to_ptr.vmem [resolvable:$true] %s1166
      %s1168 = sshll.u32 %s20, 4
      %s1169 = int_to_ptr.hbm [resolvable:$true] %s1168
      %1174 = dma.vmem_to_hbm [thread:$0]  %s1167, 256, %s1169, [#allocation4], 128, 128, 8
    $region133: #{tpu_custom_call.1} parent=1 // pred_fallthru
      _
    // Predicated region
    $region134: #{tpu_custom_call.1} parent=1 // pred_check
      _
    $region135: #{tpu_custom_call.1} parent=1 // pred_check_branch
      %1176 = sbr.rel (0) target = $region137
    $region136: #{tpu_custom_call.1} parent=1 // pred_region
      %1178 = dma.done [#allocation4], 256
    $region137: #{tpu_custom_call.1} parent=1 // pred_fallthru
      _
    %1179 = vsyncpa [#allocation3], 1
    %1180 = vsyncpa [#allocation6], 1
    %1181 = vsyncpa [#allocation9], 1
    %1182 = vsyncpa [#allocation12], 1
    %1183 = vsyncpa [#allocation15], 1
    %1184 = vsyncpa [#allocation18], 1
    %1185 = vsyncpa [#allocation21], 1
    %1186 = vsyncpa [#allocation4], 1

// kernel: tpu_custom_call.1
$region0: #{tpu_custom_call.1}
  #allocation0 [shape = 'u32[]', space=smem, size = 0x4, offset = 0x4, fixed_abs, tag = 'smem constant byte address 0x4 - core index']
  #allocation1 [shape = 'u32[72,128]{1,0:T(1,128)}', space=vmem, size = 0x9000, scoped, tag = 'internal scratch']
  %s0 = inlined_call_operand.hbm [shape: f32[16,128], index: 0, kind: input, shape index: {}]
  %s1 = inlined_call_operand.hbm [shape: f32[16,64], index: 1, kind: input, shape index: {}]
  %s2 = inlined_call_operand.hbm [shape: bf16[64,384], index: 2, kind: input, shape index: {}]
  %s3 = inlined_call_operand.hbm [shape: f32[1,384], index: 3, kind: input, shape index: {}]
  %s4 = inlined_call_operand.hbm [shape: bf16[64,384], index: 4, kind: input, shape index: {}]
  %s5 = inlined_call_operand.vmem [shape: f32[1,384], index: 5, kind: input, shape index: {}]
  %s6 = inlined_call_operand.hbm [shape: bf16[128,128], index: 6, kind: input, shape index: {}]
  %s7 = inlined_call_operand.vmem [shape: f32[1,128], index: 7, kind: input, shape index: {}]
  %s8 = inlined_call_operand.hbm [shape: bf16[128,128], index: 8, kind: input, shape index: {}]
  %s9 = inlined_call_operand.vmem [shape: f32[1,128], index: 9, kind: input, shape index: {}]
  %s10 = inlined_call_operand.hbm [shape: bf16[128,128], index: 10, kind: input, shape index: {}]
  %s11 = inlined_call_operand.vmem [shape: f32[1,128], index: 11, kind: input, shape index: {}]
  %s12 = inlined_call_operand.hbm [shape: bf16[128,128], index: 12, kind: input, shape index: {}]
  %s13 = inlined_call_operand.vmem [shape: f32[1,128], index: 13, kind: input, shape index: {}]
  %s14 = inlined_call_operand.hbm [shape: bf16[128,128], index: 14, kind: input, shape index: {}]
  %s15 = inlined_call_operand.vmem [shape: f32[1,128], index: 15, kind: input, shape index: {}]
  %s16 = inlined_call_operand.hbm [shape: bf16[128,128], index: 16, kind: input, shape index: {}]
  %s17 = inlined_call_operand.vmem [shape: f32[1,128], index: 17, kind: input, shape index: {}]
  %s18 = inlined_call_operand.hbm [shape: bf16[128,128], index: 18, kind: input, shape index: {}]
  %s19 = inlined_call_operand.vmem [shape: f32[1,128], index: 19, kind: input, shape index: {}]
  %s20 = inlined_call_operand.hbm [shape: f32[16,128], index: 20, kind: output, shape index: {}]
  %s21 = sld [smem:[#allocation0]]
  $region138: #{tpu_custom_call.1} parent=0
    _
  %s23 = ssub.s32 1, %s21
  %s24 = scalar_select 0, %s23, %s21
  $region1: #{tpu_custom_call.1} parent=0
    #allocation2 [shape = 'u8[8192]{0}', space=vmem, size = 0x2000, scoped, tag = 'input window, operand 0, single buffered']
    #allocation3 [shape = 's32[1]{0}', space=sflag, size = 0x4, scoped, tag = 'scoped memory for tpu_custom_call.1']
    #allocation4 [shape = 's32[1]{0}', space=sflag, size = 0x4, scoped, tag = 'scoped memory for tpu_custom_call.1']
    #allocation5 [shape = 'u8[8192]{0}', space=vmem, size = 0x2000, scoped, tag = 'input window, operand 1, single buffered']
    #allocation6 [shape = 's32[1]{0}', space=sflag, size = 0x4, scoped, tag = 'scoped memory for tpu_custom_call.1']
    #allocation7 [shape = 'u8[49152]{0}', space=vmem, size = 0xc000, scoped, tag = 'input window, operand 2, single buffered']
    #allocation8 [shape = 'u8[1536]{0}', space=vmem, size = 0x800, scoped, tag = 'input window, operand 3, single buffered']
    #allocation9 [shape = 's32[1]{0}', space=sflag, size = 0x4, scoped, tag = 'scoped memory for tpu_custom_call.1']
    #allocation10 [shape = 'u8[49152]{0}', space=vmem, size = 0xc000, scoped, tag = 'input window, operand 4, single buffered']
    #allocation11 [shape = 'u8[32768]{0}', space=vmem, size = 0x8000, scoped, tag = 'input window, operand 6, single buffered']
    #allocation12 [shape = 's32[1]{0}', space=sflag, size = 0x4, scoped, tag = 'scoped memory for tpu_custom_call.1']
    #allocation13 [shape = 'u8[32768]{0}', space=vmem, size = 0x8000, scoped, tag = 'input window, operand 8, single buffered']
    #allocation14 [shape = 'u8[32768]{0}', space=vmem, size = 0x8000, scoped, tag = 'input window, operand 10, single buffered']
    #allocation15 [shape = 's32[1]{0}', space=sflag, size = 0x4, scoped, tag = 'scoped memory for tpu_custom_call.1']
    #allocation16 [shape = 'u8[32768]{0}', space=vmem, size = 0x8000, scoped, tag = 'input window, operand 12, single buffered']
    #allocation17 [shape = 'u8[32768]{0}', space=vmem, size = 0x8000, scoped, tag = 'input window, operand 14, single buffered']
    #allocation18 [shape = 's32[1]{0}', space=sflag, size = 0x4, scoped, tag = 'scoped memory for tpu_custom_call.1']
    #allocation19 [shape = 'u8[32768]{0}', space=vmem, size = 0x8000, scoped, tag = 'input window, operand 16, single buffered']
    #allocation20 [shape = 'u8[32768]{0}', space=vmem, size = 0x8000, scoped, tag = 'input window, operand 18, single buffered']
    #allocation21 [shape = 's32[1]{0}', space=sflag, size = 0x4, scoped, tag = 'scoped memory for tpu_custom_call.1']
    #allocation22 [shape = 'u8[8192]{0}', space=vmem, size = 0x2000, scoped, tag = 'output window, operand 0, single buffered']
    %25 = vsyncpa [#allocation3], 0
    %26 = vsyncpa [#allocation6], 0
    %27 = vsyncpa [#allocation9], 0
    %28 = vsyncpa [#allocation12], 0
    %29 = vsyncpa [#allocation15], 0
    %30 = vsyncpa [#allocation18], 0
    %31 = vsyncpa [#allocation21], 0
    %32 = vsyncpa [#allocation4], 0
    // Predicated region
    $region2: #{tpu_custom_call.1} parent=1 // pred_check
      _
    $region3: #{tpu_custom_call.1} parent=1 // pred_check_branch
      %34 = sbr.rel (0) target = $region5
    $region4: #{tpu_custom_call.1} parent=1 // pred_region
      %36 = vsyncadd [#allocation3], 0
      %s37 = sshll.u32 %s0, 4
      %s38 = int_to_ptr.hbm [resolvable:$true] %s37
      %s39 = sshll.u32 [#allocation2], 4
      %s40 = int_to_ptr.vmem [resolvable:$true] %s39
      %45 = dma.hbm_to_vmem [thread:$0]  %s38, 256, %s40, [#allocation3], 128, 128, 8
    $region5: #{tpu_custom_call.1} parent=1 // pred_fallthru
      _
    // Predicated region
    $region6: #{tpu_custom_call.1} parent=1 // pred_check
      _
    $region7: #{tpu_custom_call.1} parent=1 // pred_check_branch
      %47 = sbr.rel (0) target = $region9
    $region8: #{tpu_custom_call.1} parent=1 // pred_region
      %49 = vsyncadd [#allocation6], 0
      %s50 = sshll.u32 %s1, 4
      %s51 = int_to_ptr.hbm [resolvable:$true] %s50
      %s52 = sshll.u32 [#allocation5], 4
      %s53 = int_to_ptr.vmem [resolvable:$true] %s52
      %58 = dma.hbm_to_vmem [thread:$0]  %s51, 256, %s53, [#allocation6], 128, 128, 8
    $region9: #{tpu_custom_call.1} parent=1 // pred_fallthru
      _
    // Predicated region
    $region10: #{tpu_custom_call.1} parent=1 // pred_check
      _
    $region11: #{tpu_custom_call.1} parent=1 // pred_check_branch
      %60 = sbr.rel (0) target = $region13
    $region12: #{tpu_custom_call.1} parent=1 // pred_region
      %62 = vsyncadd [#allocation6], 0
      %s63 = sshll.u32 %s2, 4
      %s64 = int_to_ptr.hbm [resolvable:$true] %s63
      %s65 = sshll.u32 [#allocation7], 4
      %s66 = int_to_ptr.vmem [resolvable:$true] %s65
      %71 = dma.hbm_to_vmem [thread:$0]  %s64, 1536, %s66, [#allocation6], 192, 192, 12
    $region13: #{tpu_custom_call.1} parent=1 // pred_fallthru
      _
    // Predicated region
    $region14: #{tpu_custom_call.1} parent=1 // pred_check
      _
    $region15: #{tpu_custom_call.1} parent=1 // pred_check_branch
      %73 = sbr.rel (0) target = $region17
    $region16: #{tpu_custom_call.1} parent=1 // pred_region
      %75 = vsyncadd [#allocation9], 0
      %s77 = sshll.u32 %s3, 4
      %s78 = int_to_ptr.hbm [resolvable:$true] %s77
      %s79 = sshll.u32 [#allocation8], 4
      %s80 = int_to_ptr.vmem [resolvable:$true] %s79
      %82 = dma.hbm_to_vmem [thread:$0]  %s78, 48, %s80, [#allocation9]
    $region17: #{tpu_custom_call.1} parent=1 // pred_fallthru
      _
    // Predicated region
    $region18: #{tpu_custom_call.1} parent=1 // pred_check
      _
    $region19: #{tpu_custom_call.1} parent=1 // pred_check_branch
      %84 = sbr.rel (0) target = $region21
    $region20: #{tpu_custom_call.1} parent=1 // pred_region
      %86 = vsyncadd [#allocation9], 0
      %s87 = sshll.u32 %s4, 4
      %s88 = int_to_ptr.hbm [resolvable:$true] %s87
      %s89 = sshll.u32 [#allocation10], 4
      %s90 = int_to_ptr.vmem [resolvable:$true] %s89
      %95 = dma.hbm_to_vmem [thread:$0]  %s88, 1536, %s90, [#allocation9], 192, 192, 12
    $region21: #{tpu_custom_call.1} parent=1 // pred_fallthru
      _
    // Predicated region
    $region22: #{tpu_custom_call.1} parent=1 // pred_check
      _
    $region23: #{tpu_custom_call.1} parent=1 // pred_check_branch
      %97 = sbr.rel (0) target = $region25
    $region24: #{tpu_custom_call.1} parent=1 // pred_region
      _
    $region25: #{tpu_custom_call.1} parent=1 // pred_fallthru
      _
    // Predicated region
    $region26: #{tpu_custom_call.1} parent=1 // pred_check
      _
    $region27: #{tpu_custom_call.1} parent=1 // pred_check_branch
      %99 = sbr.rel (0) target = $region29
    $region28: #{tpu_custom_call.1} parent=1 // pred_region
      %101 = vsyncadd [#allocation12], 0
      %s102 = sshll.u32 %s6, 4
      %s103 = int_to_ptr.hbm [resolvable:$true] %s102
      %s104 = sshll.u32 [#allocation11], 4
      %s105 = int_to_ptr.vmem [resolvable:$true] %s104
      %110 = dma.hbm_to_vmem [thread:$0]  %s103, 1024, %s105, [#allocation12], 64, 64, 4
    $region29: #{tpu_custom_call.1} parent=1 // pred_fallthru
      _
    // Predicated region
    $region30: #{tpu_custom_call.1} parent=1 // pred_check
      _
    $region31: #{tpu_custom_call.1} parent=1 // pred_check_branch
      %112 = sbr.rel (0) target = $region33
    $region32: #{tpu_custom_call.1} parent=1 // pred_region
      _
    $region33: #{tpu_custom_call.1} parent=1 // pred_fallthru
      _
    // Predicated region
    $region34: #{tpu_custom_call.1} parent=1 // pred_check
      _
    $region35: #{tpu_custom_call.1} parent=1 // pred_check_branch
      %114 = sbr.rel (0) target = $region37
    $region36: #{tpu_custom_call.1} parent=1 // pred_region
      %116 = vsyncadd [#allocation12], 0
      %s117 = sshll.u32 %s8, 4
      %s118 = int_to_ptr.hbm [resolvable:$true] %s117
      %s119 = sshll.u32 [#allocation13], 4
      %s120 = int_to_ptr.vmem [resolvable:$true] %s119
      %125 = dma.hbm_to_vmem [thread:$0]  %s118, 1024, %s120, [#allocation12], 64, 64, 4
    $region37: #{tpu_custom_call.1} parent=1 // pred_fallthru
      _
    // Predicated region
    $region38: #{tpu_custom_call.1} parent=1 // pred_check
      _
    $region39: #{tpu_custom_call.1} parent=1 // pred_check_branch
      %127 = sbr.rel (0) target = $region41
    $region40: #{tpu_custom_call.1} parent=1 // pred_region
      _
    $region41: #{tpu_custom_call.1} parent=1 // pred_fallthru
      _
    // Predicated region
    $region42: #{tpu_custom_call.1} parent=1 // pred_check
      _
    $region43: #{tpu_custom_call.1} parent=1 // pred_check_branch
      %129 = sbr.rel (0) target = $region45
    $region44: #{tpu_custom_call.1} parent=1 // pred_region
      %131 = vsyncadd [#allocation15], 0
      %s132 = sshll.u32 %s10, 4
      %s133 = int_to_ptr.hbm [resolvable:$true] %s132
      %s134 = sshll.u32 [#allocation14], 4
      %s135 = int_to_ptr.vmem [resolvable:$true] %s134
      %140 = dma.hbm_to_vmem [thread:$0]  %s133, 1024, %s135, [#allocation15], 64, 64, 4
    $region45: #{tpu_custom_call.1} parent=1 // pred_fallthru
      _
    // Predicated region
    $region46: #{tpu_custom_call.1} parent=1 // pred_check
      _
    $region47: #{tpu_custom_call.1} parent=1 // pred_check_branch
      %142 = sbr.rel (0) target = $region49
    $region48: #{tpu_custom_call.1} parent=1 // pred_region
      _
    $region49: #{tpu_custom_call.1} parent=1 // pred_fallthru
      _
    // Predicated region
    $region50: #{tpu_custom_call.1} parent=1 // pred_check
      _
    $region51: #{tpu_custom_call.1} parent=1 // pred_check_branch
      %144 = sbr.rel (0) target = $region53
    $region52: #{tpu_custom_call.1} parent=1 // pred_region
      %146 = vsyncadd [#allocation15], 0
      %s147 = sshll.u32 %s12, 4
      %s148 = int_to_ptr.hbm [resolvable:$true] %s147
      %s149 = sshll.u32 [#allocation16], 4
      %s150 = int_to_ptr.vmem [resolvable:$true] %s149
      %155 = dma.hbm_to_vmem [thread:$0]  %s148, 1024, %s150, [#allocation15], 64, 64, 4
    $region53: #{tpu_custom_call.1} parent=1 // pred_fallthru
      _
    // Predicated region
    $region54: #{tpu_custom_call.1} parent=1 // pred_check
      _
    $region55: #{tpu_custom_call.1} parent=1 // pred_check_branch
      %157 = sbr.rel (0) target = $region57
    $region56: #{tpu_custom_call.1} parent=1 // pred_region
      _
    $region57: #{tpu_custom_call.1} parent=1 // pred_fallthru
      _
    // Predicated region
    $region58: #{tpu_custom_call.1} parent=1 // pred_check
      _
    $region59: #{tpu_custom_call.1} parent=1 // pred_check_branch
      %159 = sbr.rel (0) target = $region61
    $region60: #{tpu_custom_call.1} parent=1 // pred_region
      %161 = vsyncadd [#allocation18], 0
      %s162 = sshll.u32 %s14, 4
      %s163 = int_to_ptr.hbm [resolvable:$true] %s162
      %s164 = sshll.u32 [#allocation17], 4
      %s165 = int_to_ptr.vmem [resolvable:$true] %s164
      %170 = dma.hbm_to_vmem [thread:$0]  %s163, 1024, %s165, [#allocation18], 64, 64, 4
    $region61: #{tpu_custom_call.1} parent=1 // pred_fallthru
      _
    // Predicated region
    $region62: #{tpu_custom_call.1} parent=1 // pred_check
      _
    $region63: #{tpu_custom_call.1} parent=1 // pred_check_branch
      %172 = sbr.rel (0) target = $region65
    $region64: #{tpu_custom_call.1} parent=1 // pred_region
      _
    $region65: #{tpu_custom_call.1} parent=1 // pred_fallthru
      _
    // Predicated region
    $region66: #{tpu_custom_call.1} parent=1 // pred_check
      _
    $region67: #{tpu_custom_call.1} parent=1 // pred_check_branch
      %174 = sbr.rel (0) target = $region69
    $region68: #{tpu_custom_call.1} parent=1 // pred_region
      %176 = vsyncadd [#allocation18], 0
      %s177 = sshll.u32 %s16, 4
      %s178 = int_to_ptr.hbm [resolvable:$true] %s177
      %s179 = sshll.u32 [#allocation19], 4
      %s180 = int_to_ptr.vmem [resolvable:$true] %s179
      %185 = dma.hbm_to_vmem [thread:$0]  %s178, 1024, %s180, [#allocation18], 64, 64, 4
    $region69: #{tpu_custom_call.1} parent=1 // pred_fallthru
      _
    // Predicated region
    $region70: #{tpu_custom_call.1} parent=1 // pred_check
      _
    $region71: #{tpu_custom_call.1} parent=1 // pred_check_branch
      %187 = sbr.rel (0) target = $region73
    $region72: #{tpu_custom_call.1} parent=1 // pred_region
      _
    $region73: #{tpu_custom_call.1} parent=1 // pred_fallthru
      _
    // Predicated region
    $region74: #{tpu_custom_call.1} parent=1 // pred_check
      _
    $region75: #{tpu_custom_call.1} parent=1 // pred_check_branch
      %189 = sbr.rel (0) target = $region77
    $region76: #{tpu_custom_call.1} parent=1 // pred_region
      %191 = vsyncadd [#allocation21], 0
      %s192 = sshll.u32 %s18, 4
      %s193 = int_to_ptr.hbm [resolvable:$true] %s192
      %s194 = sshll.u32 [#allocation20], 4
      %s195 = int_to_ptr.vmem [resolvable:$true] %s194
      %200 = dma.hbm_to_vmem [thread:$0]  %s193, 1024, %s195, [#allocation21], 64, 64, 4
    $region77: #{tpu_custom_call.1} parent=1 // pred_fallthru
      _
    // Predicated region
    $region78: #{tpu_custom_call.1} parent=1 // pred_check
      _
    $region79: #{tpu_custom_call.1} parent=1 // pred_check_branch
      %202 = sbr.rel (0) target = $region81
    $region80: #{tpu_custom_call.1} parent=1 // pred_region
      _
    $region81: #{tpu_custom_call.1} parent=1 // pred_fallthru
      _
    // Predicated region
    $region82: #{tpu_custom_call.1} parent=1 // pred_check
      _
    $region83: #{tpu_custom_call.1} parent=1 // pred_check_branch
      %204 = sbr.rel (0) target = $region85
    $region84: #{tpu_custom_call.1} parent=1 // pred_region
      %206 = dma.done [#allocation3], 256
    $region85: #{tpu_custom_call.1} parent=1 // pred_fallthru
      _
    // Predicated region
    $region86: #{tpu_custom_call.1} parent=1 // pred_check
      _
    $region87: #{tpu_custom_call.1} parent=1 // pred_check_branch
      %208 = sbr.rel (0) target = $region89
    $region88: #{tpu_custom_call.1} parent=1 // pred_region
      %210 = dma.done [#allocation6], 256
    $region89: #{tpu_custom_call.1} parent=1 // pred_fallthru
      _
    // Predicated region
    $region90: #{tpu_custom_call.1} parent=1 // pred_check
      _
    $region91: #{tpu_custom_call.1} parent=1 // pred_check_branch
      %212 = sbr.rel (0) target = $region93
    $region92: #{tpu_custom_call.1} parent=1 // pred_region
      %214 = dma.done [#allocation6], 1536
    $region93: #{tpu_custom_call.1} parent=1 // pred_fallthru
      _
    // Predicated region
    $region94: #{tpu_custom_call.1} parent=1 // pred_check
      _
    $region95: #{tpu_custom_call.1} parent=1 // pred_check_branch
      %216 = sbr.rel (0) target = $region97
    $region96: #{tpu_custom_call.1} parent=1 // pred_region
      %218 = dma.done [#allocation9], 48
    $region97: #{tpu_custom_call.1} parent=1 // pred_fallthru
      _
    // Predicated region
    $region98: #{tpu_custom_call.1} parent=1 // pred_check
      _
    $region99: #{tpu_custom_call.1} parent=1 // pred_check_branch
      %220 = sbr.rel (0) target = $region101
    $region100: #{tpu_custom_call.1} parent=1 // pred_region
      %222 = dma.done [#allocation9], 1536
    $region101: #{tpu_custom_call.1} parent=1 // pred_fallthru
      _
    // Predicated region
    $region102: #{tpu_custom_call.1} parent=1 // pred_check
      _
    $region103: #{tpu_custom_call.1} parent=1 // pred_check_branch
      %224 = sbr.rel (0) target = $region105
    $region104: #{tpu_custom_call.1} parent=1 // pred_region
      %226 = dma.done [#allocation12], 1024
    $region105: #{tpu_custom_call.1} parent=1 // pred_fallthru
      _
    // Predicated region
    $region106: #{tpu_custom_call.1} parent=1 // pred_check
      _
    $region107: #{tpu_custom_call.1} parent=1 // pred_check_branch
      %228 = sbr.rel (0) target = $region109
    $region108: #{tpu_custom_call.1} parent=1 // pred_region
      %230 = dma.done [#allocation12], 1024
    $region109: #{tpu_custom_call.1} parent=1 // pred_fallthru
      _
    // Predicated region
    $region110: #{tpu_custom_call.1} parent=1 // pred_check
      _
    $region111: #{tpu_custom_call.1} parent=1 // pred_check_branch
      %232 = sbr.rel (0) target = $region113
    $region112: #{tpu_custom_call.1} parent=1 // pred_region
      %234 = dma.done [#allocation15], 1024
    $region113: #{tpu_custom_call.1} parent=1 // pred_fallthru
      _
    // Predicated region
    $region114: #{tpu_custom_call.1} parent=1 // pred_check
      _
    $region115: #{tpu_custom_call.1} parent=1 // pred_check_branch
      %236 = sbr.rel (0) target = $region117
    $region116: #{tpu_custom_call.1} parent=1 // pred_region
      %238 = dma.done [#allocation15], 1024
    $region117: #{tpu_custom_call.1} parent=1 // pred_fallthru
      _
    // Predicated region
    $region118: #{tpu_custom_call.1} parent=1 // pred_check
      _
    $region119: #{tpu_custom_call.1} parent=1 // pred_check_branch
      %240 = sbr.rel (0) target = $region121
    $region120: #{tpu_custom_call.1} parent=1 // pred_region
      %242 = dma.done [#allocation18], 1024
    $region121: #{tpu_custom_call.1} parent=1 // pred_fallthru
      _
    // Predicated region
    $region122: #{tpu_custom_call.1} parent=1 // pred_check
      _
    $region123: #{tpu_custom_call.1} parent=1 // pred_check_branch
      %244 = sbr.rel (0) target = $region125
    $region124: #{tpu_custom_call.1} parent=1 // pred_region
      %246 = dma.done [#allocation18], 1024
    $region125: #{tpu_custom_call.1} parent=1 // pred_fallthru
      _
    // Predicated region
    $region126: #{tpu_custom_call.1} parent=1 // pred_check
      _
    $region127: #{tpu_custom_call.1} parent=1 // pred_check_branch
      %248 = sbr.rel (0) target = $region129
    $region128: #{tpu_custom_call.1} parent=1 // pred_region
      %250 = dma.done [#allocation21], 1024
    $region129: #{tpu_custom_call.1} parent=1 // pred_fallthru
      _
    %v252 = vld [vmem:[#allocation5] sm:$0xff]
    %v253 = vld [vmem:[#allocation5 + $0x8] sm:$0xff]
    %v254 = vmax.f32 %v252, 0.0
    %v255 = vmax.f32 %v253, 0.0
    %vm256 = vcmp.ne.f32.partialorder %v252, %v252
    %vm257 = vcmp.ne.f32.partialorder %v253, %v253
    %v258 = vadd.f32 %v252, 0.0
    %v259 = vadd.f32 %v253, 0.0
    %v260 = vand.u32 2147483647, %v252
    %v261 = vand.u32 2147483647, %v253
    %v262 = vsub.f32 0.0, %v260
    %v263 = vsub.f32 0.0, %v261
    %v264 = vmul.f32 %v262, 1.442695
    %v265 = vpow.pop %v264
    %v266 = vmul.f32 %v263, 1.442695
    %v267 = vpow.pop %v266
    %v268 = vadd.f32 %v265, 1.0
    %v269 = vlog2.pop %v268
    %v270 = vmul.f32 %v269, 0.6931472
    %v271 = vmul.f32 -0.5, %v265
    %v272 = vadd.f32 %v271, 1.0
    %v273 = vmul.f32 %v272, %v265
    %v274 = vand.u32 2147483647, %v265
    %vm275 = vcmp.lt.f32.partialorder %v274, 0.0004427343
    %v276 = vsel %vm275, %v273, %v270
    %v277 = vadd.f32 %v267, 1.0
    %v278 = vlog2.pop %v277
    %v279 = vmul.f32 %v278, 0.6931472
    %v280 = vmul.f32 -0.5, %v267
    %v281 = vadd.f32 %v280, 1.0
    %v282 = vmul.f32 %v281, %v267
    %v283 = vand.u32 2147483647, %v267
    %vm284 = vcmp.lt.f32.partialorder %v283, 0.0004427343
    %v285 = vsel %vm284, %v282, %v279
    %v286 = vadd.f32 %v254, %v276
    %v287 = vadd.f32 %v255, %v285
    %v288 = vsel %vm256, %v258, %v286
    %v289 = vsel %vm257, %v259, %v287
    %v290 = vtanh.pop %v288
    %v291 = vtanh.pop %v289
    %v292 = vmul.f32 %v252, %v290
    %v293 = vmul.f32 %v253, %v291
    %v294 = vpack.c.bf16 %v293, %v292
    %v295 = vld [vmem:[#allocation7] sm:$0xff]
    %v296 = vld [vmem:[#allocation7 + $0x8] sm:$0xf]
    %v297 = vld [vmem:[#allocation7 + $0xc] sm:$0xff]
    %v298 = vld [vmem:[#allocation7 + $0x14] sm:$0xf]
    %v299 = vld [vmem:[#allocation7 + $0x18] sm:$0xff]
    %v300 = vld [vmem:[#allocation7 + $0x20] sm:$0xf]
    %v301 = vld [vmem:[#allocation7 + $0x24] sm:$0xff]
    %v302 = vld [vmem:[#allocation7 + $0x2c] sm:$0xf]
    %v303 = vld [vmem:[#allocation7 + $0x30] sm:$0xff]
    %v304 = vld [vmem:[#allocation7 + $0x38] sm:$0xf]
    %v305 = vld [vmem:[#allocation7 + $0x3c] sm:$0xff]
    %v306 = vld [vmem:[#allocation7 + $0x44] sm:$0xf]
    %v307 = vld [vmem:[#allocation7 + $0x48] sm:$0xff]
    %v308 = vld [vmem:[#allocation7 + $0x50] sm:$0xf]
    %v309 = vld [vmem:[#allocation7 + $0x54] sm:$0xff]
    %v310 = vld [vmem:[#allocation7 + $0x5c] sm:$0xf]
    %v311 = vld [vmem:[#allocation8] sm:$0x7]
    %v313 = vperm.slane %v311, 0
    %v314 = vperm.slane %v311, 1
    %v315 = vperm.slane %v311, 2
    %v335 = vunpack.c.l.b16 %v295
    %v336 = vunpack.c.h.b16 %v295
    %v337 = vunpack.c.l.b16 %v296
    %v338 = vunpack.c.l.b16 %v297
    %v339 = vunpack.c.h.b16 %v297
    %v340 = vunpack.c.l.b16 %v298
    %v341 = vunpack.c.l.b16 %v299
    %v342 = vunpack.c.h.b16 %v299
    %v343 = vunpack.c.l.b16 %v300
    %v344 = vunpack.c.l.b16 %v301
    %v345 = vunpack.c.h.b16 %v301
    %v346 = vunpack.c.l.b16 %v302
    %v347 = vunpack.c.l.b16 %v303
    %v348 = vunpack.c.h.b16 %v303
    %v349 = vunpack.c.l.b16 %v304
    %v350 = vunpack.c.l.b16 %v305
    %v351 = vunpack.c.h.b16 %v305
    %v352 = vunpack.c.l.b16 %v306
    %v353 = vunpack.c.l.b16 %v307
    %v354 = vunpack.c.h.b16 %v307
    %v355 = vunpack.c.l.b16 %v308
    %v356 = vunpack.c.l.b16 %v309
    %v357 = vunpack.c.h.b16 %v309
    %v358 = vunpack.c.l.b16 %v310
    %v359 = vpack.c.b16 %v338, %v335
    %v360 = vpack.c.b16 %v339, %v336
    %v361 = vpack.c.b16 %v340, %v337
    %v362 = vpack.c.b16 %v344, %v341
    %v363 = vpack.c.b16 %v345, %v342
    %v364 = vpack.c.b16 %v346, %v343
    %v365 = vpack.c.b16 %v350, %v347
    %v366 = vpack.c.b16 %v351, %v348
    %v367 = vpack.c.b16 %v352, %v349
    %v368 = vpack.c.b16 %v356, %v353
    %v369 = vpack.c.b16 %v357, %v354
    %v370 = vpack.c.b16 %v358, %v355
    %vm383 = vcmask 523264
    %v385 = vsel %vm383, %v294, 0
    %387 = vmatpush.bf16.msra.mxu0 0
    %388 = vmatpush.bf16.msra.mxu0 0
    %389 = vmatpush.bf16.msra.mxu0 0
    %390 = vmatpush.bf16.msra.mxu0 0
    %391 = vmatpush.bf16.msra.mxu0 %v368
    %392 = vmatpush.bf16.msra.mxu0 %v365
    %393 = vmatpush.bf16.msra.mxu0 %v362
    %394 = vmatpush.bf16.msra.mxu0 %v359
    %395 = vmatmul.bf16.gmra.mxu0 %v385
    %v396 = vpop.f32.mrf.mxu0
    %v397 = vadd.f32 %v313, %v396
    %v398 = vpop.f32.mrf.mxu0
    %v399 = vadd.f32 %v313, %v398
    %400 = vdwg.mxu0
    %401 = vmatpush.bf16.msra.mxu0 0
    %402 = vmatpush.bf16.msra.mxu0 0
    %403 = vmatpush.bf16.msra.mxu0 0
    %404 = vmatpush.bf16.msra.mxu0 0
    %405 = vmatpush.bf16.msra.mxu0 %v369
    %406 = vmatpush.bf16.msra.mxu0 %v366
    %407 = vmatpush.bf16.msra.mxu0 %v363
    %408 = vmatpush.bf16.msra.mxu0 %v360
    %409 = vmatmul.bf16.gmra.mxu0 %v385
    %v410 = vpop.f32.mrf.mxu0
    %v411 = vadd.f32 %v314, %v410
    %v412 = vpop.f32.mrf.mxu0
    %v413 = vadd.f32 %v314, %v412
    %414 = vdwg.mxu0
    %415 = vmatpush.bf16.msra.mxu0 0
    %416 = vmatpush.bf16.msra.mxu0 0
    %417 = vmatpush.bf16.msra.mxu0 0
    %418 = vmatpush.bf16.msra.mxu0 0
    %419 = vmatpush.bf16.msra.mxu0 %v370
    %420 = vmatpush.bf16.msra.mxu0 %v367
    %421 = vmatpush.bf16.msra.mxu0 %v364
    %422 = vmatpush.bf16.msra.mxu0 %v361
    %423 = vmatmul.bf16.gmra.mxu0 %v385
    %v424 = vpop.f32.mrf.mxu0
    %v425 = vadd.f32 %v315, %v424
    %v426 = vpop.f32.mrf.mxu0
    %v427 = vadd.f32 %v315, %v426
    %428 = vdwg.mxu0
    %v429 = vld [vmem:[#allocation10] sm:$0xff]
    %v430 = vld [vmem:[#allocation10 + $0x8] sm:$0xf]
    %v431 = vld [vmem:[#allocation10 + $0xc] sm:$0xff]
    %v432 = vld [vmem:[#allocation10 + $0x14] sm:$0xf]
    %v433 = vld [vmem:[#allocation10 + $0x18] sm:$0xff]
    %v434 = vld [vmem:[#allocation10 + $0x20] sm:$0xf]
    %v435 = vld [vmem:[#allocation10 + $0x24] sm:$0xff]
    %v436 = vld [vmem:[#allocation10 + $0x2c] sm:$0xf]
    %v437 = vld [vmem:[#allocation10 + $0x30] sm:$0xff]
    %v438 = vld [vmem:[#allocation10 + $0x38] sm:$0xf]
    %v439 = vld [vmem:[#allocation10 + $0x3c] sm:$0xff]
    %v440 = vld [vmem:[#allocation10 + $0x44] sm:$0xf]
    %v441 = vld [vmem:[#allocation10 + $0x48] sm:$0xff]
    %v442 = vld [vmem:[#allocation10 + $0x50] sm:$0xf]
    %v443 = vld [vmem:[#allocation10 + $0x54] sm:$0xff]
    %v444 = vld [vmem:[#allocation10 + $0x5c] sm:$0xf]
    %v445 = vld [vmem:[%s5] sm:$0x7]
    %v447 = vperm.slane %v445, 0
    %v448 = vperm.slane %v445, 1
    %v449 = vperm.slane %v445, 2
    %v469 = vunpack.c.l.b16 %v429
    %v470 = vunpack.c.h.b16 %v429
    %v471 = vunpack.c.l.b16 %v430
    %v472 = vunpack.c.l.b16 %v431
    %v473 = vunpack.c.h.b16 %v431
    %v474 = vunpack.c.l.b16 %v432
    %v475 = vunpack.c.l.b16 %v433
    %v476 = vunpack.c.h.b16 %v433
    %v477 = vunpack.c.l.b16 %v434
    %v478 = vunpack.c.l.b16 %v435
    %v479 = vunpack.c.h.b16 %v435
    %v480 = vunpack.c.l.b16 %v436
    %v481 = vunpack.c.l.b16 %v437
    %v482 = vunpack.c.h.b16 %v437
    %v483 = vunpack.c.l.b16 %v438
    %v484 = vunpack.c.l.b16 %v439
    %v485 = vunpack.c.h.b16 %v439
    %v486 = vunpack.c.l.b16 %v440
    %v487 = vunpack.c.l.b16 %v441
    %v488 = vunpack.c.h.b16 %v441
    %v489 = vunpack.c.l.b16 %v442
    %v490 = vunpack.c.l.b16 %v443
    %v491 = vunpack.c.h.b16 %v443
    %v492 = vunpack.c.l.b16 %v444
    %v493 = vpack.c.b16 %v472, %v469
    %v494 = vpack.c.b16 %v473, %v470
    %v495 = vpack.c.b16 %v474, %v471
    %v496 = vpack.c.b16 %v478, %v475
    %v497 = vpack.c.b16 %v479, %v476
    %v498 = vpack.c.b16 %v480, %v477
    %v499 = vpack.c.b16 %v484, %v481
    %v500 = vpack.c.b16 %v485, %v482
    %v501 = vpack.c.b16 %v486, %v483
    %v502 = vpack.c.b16 %v490, %v487
    %v503 = vpack.c.b16 %v491, %v488
    %v504 = vpack.c.b16 %v492, %v489
    %517 = vmatpush.bf16.msra.mxu0 0
    %518 = vmatpush.bf16.msra.mxu0 0
    %519 = vmatpush.bf16.msra.mxu0 0
    %520 = vmatpush.bf16.msra.mxu0 0
    %521 = vmatpush.bf16.msra.mxu0 %v502
    %522 = vmatpush.bf16.msra.mxu0 %v499
    %523 = vmatpush.bf16.msra.mxu0 %v496
    %524 = vmatpush.bf16.msra.mxu0 %v493
    %525 = vmatmul.bf16.gmra.mxu0 %v385
    %v526 = vpop.f32.mrf.mxu0
    %v527 = vadd.f32 %v447, %v526
    %v528 = vpop.f32.mrf.mxu0
    %v529 = vadd.f32 %v447, %v528
    %530 = vdwg.mxu0
    %531 = vmatpush.bf16.msra.mxu0 0
    %532 = vmatpush.bf16.msra.mxu0 0
    %533 = vmatpush.bf16.msra.mxu0 0
    %534 = vmatpush.bf16.msra.mxu0 0
    %535 = vmatpush.bf16.msra.mxu0 %v503
    %536 = vmatpush.bf16.msra.mxu0 %v500
    %537 = vmatpush.bf16.msra.mxu0 %v497
    %538 = vmatpush.bf16.msra.mxu0 %v494
    %539 = vmatmul.bf16.gmra.mxu0 %v385
    %v540 = vpop.f32.mrf.mxu0
    %v541 = vadd.f32 %v448, %v540
    %v542 = vpop.f32.mrf.mxu0
    %v543 = vadd.f32 %v448, %v542
    %544 = vdwg.mxu0
    %545 = vmatpush.bf16.msra.mxu0 0
    %546 = vmatpush.bf16.msra.mxu0 0
    %547 = vmatpush.bf16.msra.mxu0 0
    %548 = vmatpush.bf16.msra.mxu0 0
    %549 = vmatpush.bf16.msra.mxu0 %v504
    %550 = vmatpush.bf16.msra.mxu0 %v501
    %551 = vmatpush.bf16.msra.mxu0 %v498
    %552 = vmatpush.bf16.msra.mxu0 %v495
    %553 = vmatmul.bf16.gmra.mxu0 %v385
    %v554 = vpop.f32.mrf.mxu0
    %v555 = vadd.f32 %v449, %v554
    %v556 = vpop.f32.mrf.mxu0
    %v557 = vadd.f32 %v449, %v556
    %558 = vdwg.mxu0
    %v559 = vld [vmem:[#allocation2] sm:$0xff]
    %v560 = vld [vmem:[#allocation2 + $0x8] sm:$0xff]
    %v561 = vld [vmem:[#allocation11] sm:$0xf]
    %v562 = vld [vmem:[#allocation11 + $0x4] sm:$0xf]
    %v563 = vld [vmem:[#allocation11 + $0x8] sm:$0xf]
    %v564 = vld [vmem:[#allocation11 + $0xc] sm:$0xf]
    %v565 = vld [vmem:[#allocation11 + $0x10] sm:$0xf]
    %v566 = vld [vmem:[#allocation11 + $0x14] sm:$0xf]
    %v567 = vld [vmem:[#allocation11 + $0x18] sm:$0xf]
    %v568 = vld [vmem:[#allocation11 + $0x1c] sm:$0xf]
    %v569 = vld [vmem:[#allocation11 + $0x20] sm:$0xf]
    %v570 = vld [vmem:[#allocation11 + $0x24] sm:$0xf]
    %v571 = vld [vmem:[#allocation11 + $0x28] sm:$0xf]
    %v572 = vld [vmem:[#allocation11 + $0x2c] sm:$0xf]
    %v573 = vld [vmem:[#allocation11 + $0x30] sm:$0xf]
    %v574 = vld [vmem:[#allocation11 + $0x34] sm:$0xf]
    %v575 = vld [vmem:[#allocation11 + $0x38] sm:$0xf]
    %v576 = vld [vmem:[#allocation11 + $0x3c] sm:$0xf]
    %v577 = vld [vmem:[%s7] sm:$0x1]
    %v578 = vld [vmem:[#allocation13] sm:$0xf]
    %v579 = vld [vmem:[#allocation13 + $0x4] sm:$0xf]
    %v580 = vld [vmem:[#allocation13 + $0x8] sm:$0xf]
    %v581 = vld [vmem:[#allocation13 + $0xc] sm:$0xf]
    %v582 = vld [vmem:[#allocation13 + $0x10] sm:$0xf]
    %v583 = vld [vmem:[#allocation13 + $0x14] sm:$0xf]
    %v584 = vld [vmem:[#allocation13 + $0x18] sm:$0xf]
    %v585 = vld [vmem:[#allocation13 + $0x1c] sm:$0xf]
    %v586 = vld [vmem:[#allocation13 + $0x20] sm:$0xf]
    %v587 = vld [vmem:[#allocation13 + $0x24] sm:$0xf]
    %v588 = vld [vmem:[#allocation13 + $0x28] sm:$0xf]
    %v589 = vld [vmem:[#allocation13 + $0x2c] sm:$0xf]
    %v590 = vld [vmem:[#allocation13 + $0x30] sm:$0xf]
    %v591 = vld [vmem:[#allocation13 + $0x34] sm:$0xf]
    %v592 = vld [vmem:[#allocation13 + $0x38] sm:$0xf]
    %v593 = vld [vmem:[#allocation13 + $0x3c] sm:$0xf]
    %v594 = vld [vmem:[%s9] sm:$0x1]
    %v595 = vpack.c.bf16 %v560, %v559
    %v597 = vperm.slane %v577, 0
    %v615 = vunpack.c.l.b16 %v561
    %v616 = vunpack.c.l.b16 %v562
    %v617 = vunpack.c.l.b16 %v563
    %v618 = vunpack.c.l.b16 %v564
    %v619 = vunpack.c.l.b16 %v565
    %v620 = vunpack.c.l.b16 %v566
    %v621 = vunpack.c.l.b16 %v567
    %v622 = vunpack.c.l.b16 %v568
    %v623 = vunpack.c.l.b16 %v569
    %v624 = vunpack.c.l.b16 %v570
    %v625 = vunpack.c.l.b16 %v571
    %v626 = vunpack.c.l.b16 %v572
    %v627 = vunpack.c.l.b16 %v573
    %v628 = vunpack.c.l.b16 %v574
    %v629 = vunpack.c.l.b16 %v575
    %v630 = vunpack.c.l.b16 %v576
    %v631 = vpack.c.b16 %v616, %v615
    %v632 = vpack.c.b16 %v618, %v617
    %v633 = vpack.c.b16 %v620, %v619
    %v634 = vpack.c.b16 %v622, %v621
    %v635 = vpack.c.b16 %v624, %v623
    %v636 = vpack.c.b16 %v626, %v625
    %v637 = vpack.c.b16 %v628, %v627
    %v638 = vpack.c.b16 %v630, %v629
    %647 = vmatpush.bf16.msra.mxu0 %v638
    %648 = vmatpush.bf16.msra.mxu0 %v637
    %649 = vmatpush.bf16.msra.mxu0 %v636
    %650 = vmatpush.bf16.msra.mxu0 %v635
    %651 = vmatpush.bf16.msra.mxu0 %v634
    %652 = vmatpush.bf16.msra.mxu0 %v633
    %653 = vmatpush.bf16.msra.mxu0 %v632
    %654 = vmatpush.bf16.msra.mxu0 %v631
    %655 = vmatmul.bf16.gmra.mxu0 %v595
    %v656 = vpop.f32.mrf.mxu0
    %v657 = vadd.f32 %v597, %v656
    %v658 = vpop.f32.mrf.mxu0
    %v659 = vadd.f32 %v597, %v658
    %660 = vdwg.mxu0
    %v661 = vmul.f32 %v397, %v657
    %v662 = vmul.f32 %v399, %v659
    %v663 = vadd.f32 %v661, %v527
    %v664 = vadd.f32 %v662, %v529
    %v665 = vpack.c.bf16 %v664, %v663
    %v667 = vperm.slane %v594, 0
    %v685 = vunpack.c.l.b16 %v578
    %v686 = vunpack.c.l.b16 %v579
    %v687 = vunpack.c.l.b16 %v580
    %v688 = vunpack.c.l.b16 %v581
    %v689 = vunpack.c.l.b16 %v582
    %v690 = vunpack.c.l.b16 %v583
    %v691 = vunpack.c.l.b16 %v584
    %v692 = vunpack.c.l.b16 %v585
    %v693 = vunpack.c.l.b16 %v586
    %v694 = vunpack.c.l.b16 %v587
    %v695 = vunpack.c.l.b16 %v588
    %v696 = vunpack.c.l.b16 %v589
    %v697 = vunpack.c.l.b16 %v590
    %v698 = vunpack.c.l.b16 %v591
    %v699 = vunpack.c.l.b16 %v592
    %v700 = vunpack.c.l.b16 %v593
    %v701 = vpack.c.b16 %v686, %v685
    %v702 = vpack.c.b16 %v688, %v687
    %v703 = vpack.c.b16 %v690, %v689
    %v704 = vpack.c.b16 %v692, %v691
    %v705 = vpack.c.b16 %v694, %v693
    %v706 = vpack.c.b16 %v696, %v695
    %v707 = vpack.c.b16 %v698, %v697
    %v708 = vpack.c.b16 %v700, %v699
    %717 = vmatpush.bf16.msra.mxu0 %v708
    %718 = vmatpush.bf16.msra.mxu0 %v707
    %719 = vmatpush.bf16.msra.mxu0 %v706
    %720 = vmatpush.bf16.msra.mxu0 %v705
    %721 = vmatpush.bf16.msra.mxu0 %v704
    %722 = vmatpush.bf16.msra.mxu0 %v703
    %723 = vmatpush.bf16.msra.mxu0 %v702
    %724 = vmatpush.bf16.msra.mxu0 %v701
    %725 = vmatmul.bf16.gmra.mxu0 %v665
    %v726 = vpop.f32.mrf.mxu0
    %v727 = vadd.f32 %v667, %v726
    %v728 = vpop.f32.mrf.mxu0
    %v729 = vadd.f32 %v667, %v728
    %730 = vdwg.mxu0
    %v731 = vmax.f32 %v727, 0.0
    %v732 = vmax.f32 %v729, 0.0
    %v733 = vld [vmem:[#allocation14] sm:$0xf]
    %v734 = vld [vmem:[#allocation14 + $0x4] sm:$0xf]
    %v735 = vld [vmem:[#allocation14 + $0x8] sm:$0xf]
    %v736 = vld [vmem:[#allocation14 + $0xc] sm:$0xf]
    %v737 = vld [vmem:[#allocation14 + $0x10] sm:$0xf]
    %v738 = vld [vmem:[#allocation14 + $0x14] sm:$0xf]
    %v739 = vld [vmem:[#allocation14 + $0x18] sm:$0xf]
    %v740 = vld [vmem:[#allocation14 + $0x1c] sm:$0xf]
    %v741 = vld [vmem:[#allocation14 + $0x20] sm:$0xf]
    %v742 = vld [vmem:[#allocation14 + $0x24] sm:$0xf]
    %v743 = vld [vmem:[#allocation14 + $0x28] sm:$0xf]
    %v744 = vld [vmem:[#allocation14 + $0x2c] sm:$0xf]
    %v745 = vld [vmem:[#allocation14 + $0x30] sm:$0xf]
    %v746 = vld [vmem:[#allocation14 + $0x34] sm:$0xf]
    %v747 = vld [vmem:[#allocation14 + $0x38] sm:$0xf]
    %v748 = vld [vmem:[#allocation14 + $0x3c] sm:$0xf]
    %v749 = vld [vmem:[%s11] sm:$0x1]
    %v750 = vld [vmem:[#allocation16] sm:$0xf]
    %v751 = vld [vmem:[#allocation16 + $0x4] sm:$0xf]
    %v752 = vld [vmem:[#allocation16 + $0x8] sm:$0xf]
    %v753 = vld [vmem:[#allocation16 + $0xc] sm:$0xf]
    %v754 = vld [vmem:[#allocation16 + $0x10] sm:$0xf]
    %v755 = vld [vmem:[#allocation16 + $0x14] sm:$0xf]
    %v756 = vld [vmem:[#allocation16 + $0x18] sm:$0xf]
    %v757 = vld [vmem:[#allocation16 + $0x1c] sm:$0xf]
    %v758 = vld [vmem:[#allocation16 + $0x20] sm:$0xf]
    %v759 = vld [vmem:[#allocation16 + $0x24] sm:$0xf]
    %v760 = vld [vmem:[#allocation16 + $0x28] sm:$0xf]
    %v761 = vld [vmem:[#allocation16 + $0x2c] sm:$0xf]
    %v762 = vld [vmem:[#allocation16 + $0x30] sm:$0xf]
    %v763 = vld [vmem:[#allocation16 + $0x34] sm:$0xf]
    %v764 = vld [vmem:[#allocation16 + $0x38] sm:$0xf]
    %v765 = vld [vmem:[#allocation16 + $0x3c] sm:$0xf]
    %v766 = vld [vmem:[%s13] sm:$0x1]
    %v767 = vpack.c.bf16 %v732, %v731
    %v769 = vperm.slane %v749, 0
    %v787 = vunpack.c.l.b16 %v733
    %v788 = vunpack.c.l.b16 %v734
    %v789 = vunpack.c.l.b16 %v735
    %v790 = vunpack.c.l.b16 %v736
    %v791 = vunpack.c.l.b16 %v737
    %v792 = vunpack.c.l.b16 %v738
    %v793 = vunpack.c.l.b16 %v739
    %v794 = vunpack.c.l.b16 %v740
    %v795 = vunpack.c.l.b16 %v741
    %v796 = vunpack.c.l.b16 %v742
    %v797 = vunpack.c.l.b16 %v743
    %v798 = vunpack.c.l.b16 %v744
    %v799 = vunpack.c.l.b16 %v745
    %v800 = vunpack.c.l.b16 %v746
    %v801 = vunpack.c.l.b16 %v747
    %v802 = vunpack.c.l.b16 %v748
    %v803 = vpack.c.b16 %v788, %v787
    %v804 = vpack.c.b16 %v790, %v789
    %v805 = vpack.c.b16 %v792, %v791
    %v806 = vpack.c.b16 %v794, %v793
    %v807 = vpack.c.b16 %v796, %v795
    %v808 = vpack.c.b16 %v798, %v797
    %v809 = vpack.c.b16 %v800, %v799
    %v810 = vpack.c.b16 %v802, %v801
    %819 = vmatpush.bf16.msra.mxu0 %v810
    %820 = vmatpush.bf16.msra.mxu0 %v809
    %821 = vmatpush.bf16.msra.mxu0 %v808
    %822 = vmatpush.bf16.msra.mxu0 %v807
    %823 = vmatpush.bf16.msra.mxu0 %v806
    %824 = vmatpush.bf16.msra.mxu0 %v805
    %825 = vmatpush.bf16.msra.mxu0 %v804
    %826 = vmatpush.bf16.msra.mxu0 %v803
    %827 = vmatmul.bf16.gmra.mxu0 %v767
    %v828 = vpop.f32.mrf.mxu0
    %v829 = vadd.f32 %v769, %v828
    %v830 = vpop.f32.mrf.mxu0
    %v831 = vadd.f32 %v769, %v830
    %832 = vdwg.mxu0
    %v833 = vmul.f32 %v411, %v829
    %v834 = vmul.f32 %v413, %v831
    %v835 = vadd.f32 %v833, %v541
    %v836 = vadd.f32 %v834, %v543
    %v837 = vpack.c.bf16 %v836, %v835
    %v839 = vperm.slane %v766, 0
    %v857 = vunpack.c.l.b16 %v750
    %v858 = vunpack.c.l.b16 %v751
    %v859 = vunpack.c.l.b16 %v752
    %v860 = vunpack.c.l.b16 %v753
    %v861 = vunpack.c.l.b16 %v754
    %v862 = vunpack.c.l.b16 %v755
    %v863 = vunpack.c.l.b16 %v756
    %v864 = vunpack.c.l.b16 %v757
    %v865 = vunpack.c.l.b16 %v758
    %v866 = vunpack.c.l.b16 %v759
    %v867 = vunpack.c.l.b16 %v760
    %v868 = vunpack.c.l.b16 %v761
    %v869 = vunpack.c.l.b16 %v762
    %v870 = vunpack.c.l.b16 %v763
    %v871 = vunpack.c.l.b16 %v764
    %v872 = vunpack.c.l.b16 %v765
    %v873 = vpack.c.b16 %v858, %v857
    %v874 = vpack.c.b16 %v860, %v859
    %v875 = vpack.c.b16 %v862, %v861
    %v876 = vpack.c.b16 %v864, %v863
    %v877 = vpack.c.b16 %v866, %v865
    %v878 = vpack.c.b16 %v868, %v867
    %v879 = vpack.c.b16 %v870, %v869
    %v880 = vpack.c.b16 %v872, %v871
    %889 = vmatpush.bf16.msra.mxu0 %v880
    %890 = vmatpush.bf16.msra.mxu0 %v879
    %891 = vmatpush.bf16.msra.mxu0 %v878
    %892 = vmatpush.bf16.msra.mxu0 %v877
    %893 = vmatpush.bf16.msra.mxu0 %v876
    %894 = vmatpush.bf16.msra.mxu0 %v875
    %895 = vmatpush.bf16.msra.mxu0 %v874
    %896 = vmatpush.bf16.msra.mxu0 %v873
    %897 = vmatmul.bf16.gmra.mxu0 %v837
    %v898 = vpop.f32.mrf.mxu0
    %v899 = vadd.f32 %v839, %v898
    %v900 = vpop.f32.mrf.mxu0
    %v901 = vadd.f32 %v839, %v900
    %902 = vdwg.mxu0
    %v903 = vmax.f32 %v899, 0.0
    %v904 = vmax.f32 %v901, 0.0
    %v905 = vld [vmem:[#allocation17] sm:$0xf]
    %v906 = vld [vmem:[#allocation17 + $0x4] sm:$0xf]
    %v907 = vld [vmem:[#allocation17 + $0x8] sm:$0xf]
    %v908 = vld [vmem:[#allocation17 + $0xc] sm:$0xf]
    %v909 = vld [vmem:[#allocation17 + $0x10] sm:$0xf]
    %v910 = vld [vmem:[#allocation17 + $0x14] sm:$0xf]
    %v911 = vld [vmem:[#allocation17 + $0x18] sm:$0xf]
    %v912 = vld [vmem:[#allocation17 + $0x1c] sm:$0xf]
    %v913 = vld [vmem:[#allocation17 + $0x20] sm:$0xf]
    %v914 = vld [vmem:[#allocation17 + $0x24] sm:$0xf]
    %v915 = vld [vmem:[#allocation17 + $0x28] sm:$0xf]
    %v916 = vld [vmem:[#allocation17 + $0x2c] sm:$0xf]
    %v917 = vld [vmem:[#allocation17 + $0x30] sm:$0xf]
    %v918 = vld [vmem:[#allocation17 + $0x34] sm:$0xf]
    %v919 = vld [vmem:[#allocation17 + $0x38] sm:$0xf]
    %v920 = vld [vmem:[#allocation17 + $0x3c] sm:$0xf]
    %v921 = vld [vmem:[%s15] sm:$0x1]
    %v922 = vld [vmem:[#allocation19] sm:$0xf]
    %v923 = vld [vmem:[#allocation19 + $0x4] sm:$0xf]
    %v924 = vld [vmem:[#allocation19 + $0x8] sm:$0xf]
    %v925 = vld [vmem:[#allocation19 + $0xc] sm:$0xf]
    %v926 = vld [vmem:[#allocation19 + $0x10] sm:$0xf]
    %v927 = vld [vmem:[#allocation19 + $0x14] sm:$0xf]
    %v928 = vld [vmem:[#allocation19 + $0x18] sm:$0xf]
    %v929 = vld [vmem:[#allocation19 + $0x1c] sm:$0xf]
    %v930 = vld [vmem:[#allocation19 + $0x20] sm:$0xf]
    %v931 = vld [vmem:[#allocation19 + $0x24] sm:$0xf]
    %v932 = vld [vmem:[#allocation19 + $0x28] sm:$0xf]
    %v933 = vld [vmem:[#allocation19 + $0x2c] sm:$0xf]
    %v934 = vld [vmem:[#allocation19 + $0x30] sm:$0xf]
    %v935 = vld [vmem:[#allocation19 + $0x34] sm:$0xf]
    %v936 = vld [vmem:[#allocation19 + $0x38] sm:$0xf]
    %v937 = vld [vmem:[#allocation19 + $0x3c] sm:$0xf]
    %v938 = vld [vmem:[%s17] sm:$0x1]
    %v939 = vpack.c.bf16 %v904, %v903
    %v941 = vperm.slane %v921, 0
    %v959 = vunpack.c.l.b16 %v905
    %v960 = vunpack.c.l.b16 %v906
    %v961 = vunpack.c.l.b16 %v907
    %v962 = vunpack.c.l.b16 %v908
    %v963 = vunpack.c.l.b16 %v909
    %v964 = vunpack.c.l.b16 %v910
    %v965 = vunpack.c.l.b16 %v911
    %v966 = vunpack.c.l.b16 %v912
    %v967 = vunpack.c.l.b16 %v913
    %v968 = vunpack.c.l.b16 %v914
    %v969 = vunpack.c.l.b16 %v915
    %v970 = vunpack.c.l.b16 %v916
    %v971 = vunpack.c.l.b16 %v917
    %v972 = vunpack.c.l.b16 %v918
    %v973 = vunpack.c.l.b16 %v919
    %v974 = vunpack.c.l.b16 %v920
    %v975 = vpack.c.b16 %v960, %v959
    %v976 = vpack.c.b16 %v962, %v961
    %v977 = vpack.c.b16 %v964, %v963
    %v978 = vpack.c.b16 %v966, %v965
    %v979 = vpack.c.b16 %v968, %v967
    %v980 = vpack.c.b16 %v970, %v969
    %v981 = vpack.c.b16 %v972, %v971
    %v982 = vpack.c.b16 %v974, %v973
    %991 = vmatpush.bf16.msra.mxu0 %v982
    %992 = vmatpush.bf16.msra.mxu0 %v981
    %993 = vmatpush.bf16.msra.mxu0 %v980
    %994 = vmatpush.bf16.msra.mxu0 %v979
    %995 = vmatpush.bf16.msra.mxu0 %v978
    %996 = vmatpush.bf16.msra.mxu0 %v977
    %997 = vmatpush.bf16.msra.mxu0 %v976
    %998 = vmatpush.bf16.msra.mxu0 %v975
    %999 = vmatmul.bf16.gmra.mxu0 %v939
    %v1000 = vpop.f32.mrf.mxu0
    %v1001 = vadd.f32 %v941, %v1000
    %v1002 = vpop.f32.mrf.mxu0
    %v1003 = vadd.f32 %v941, %v1002
    %1004 = vdwg.mxu0
    %v1005 = vmul.f32 %v425, %v1001
    %v1006 = vmul.f32 %v427, %v1003
    %v1007 = vadd.f32 %v1005, %v555
    %v1008 = vadd.f32 %v1006, %v557
    %v1009 = vpack.c.bf16 %v1008, %v1007
    %v1011 = vperm.slane %v938, 0
    %v1029 = vunpack.c.l.b16 %v922
    %v1030 = vunpack.c.l.b16 %v923
    %v1031 = vunpack.c.l.b16 %v924
    %v1032 = vunpack.c.l.b16 %v925
    %v1033 = vunpack.c.l.b16 %v926
    %v1034 = vunpack.c.l.b16 %v927
    %v1035 = vunpack.c.l.b16 %v928
    %v1036 = vunpack.c.l.b16 %v929
    %v1037 = vunpack.c.l.b16 %v930
    %v1038 = vunpack.c.l.b16 %v931
    %v1039 = vunpack.c.l.b16 %v932
    %v1040 = vunpack.c.l.b16 %v933
    %v1041 = vunpack.c.l.b16 %v934
    %v1042 = vunpack.c.l.b16 %v935
    %v1043 = vunpack.c.l.b16 %v936
    %v1044 = vunpack.c.l.b16 %v937
    %v1045 = vpack.c.b16 %v1030, %v1029
    %v1046 = vpack.c.b16 %v1032, %v1031
    %v1047 = vpack.c.b16 %v1034, %v1033
    %v1048 = vpack.c.b16 %v1036, %v1035
    %v1049 = vpack.c.b16 %v1038, %v1037
    %v1050 = vpack.c.b16 %v1040, %v1039
    %v1051 = vpack.c.b16 %v1042, %v1041
    %v1052 = vpack.c.b16 %v1044, %v1043
    %1061 = vmatpush.bf16.msra.mxu0 %v1052
    %1062 = vmatpush.bf16.msra.mxu0 %v1051
    %1063 = vmatpush.bf16.msra.mxu0 %v1050
    %1064 = vmatpush.bf16.msra.mxu0 %v1049
    %1065 = vmatpush.bf16.msra.mxu0 %v1048
    %1066 = vmatpush.bf16.msra.mxu0 %v1047
    %1067 = vmatpush.bf16.msra.mxu0 %v1046
    %1068 = vmatpush.bf16.msra.mxu0 %v1045
    %1069 = vmatmul.bf16.gmra.mxu0 %v1009
    %v1070 = vpop.f32.mrf.mxu0
    %v1071 = vadd.f32 %v1011, %v1070
    %v1072 = vpop.f32.mrf.mxu0
    %v1073 = vadd.f32 %v1011, %v1072
    %1074 = vdwg.mxu0
    %v1075 = vmax.f32 %v1071, 0.0
    %v1076 = vmax.f32 %v1073, 0.0
    %v1077 = vpack.c.bf16 %v1076, %v1075
    %v1078 = vld [vmem:[#allocation20] sm:$0xf]
    %v1079 = vld [vmem:[#allocation20 + $0x4] sm:$0xf]
    %v1080 = vld [vmem:[#allocation20 + $0x8] sm:$0xf]
    %v1081 = vld [vmem:[#allocation20 + $0xc] sm:$0xf]
    %v1082 = vld [vmem:[#allocation20 + $0x10] sm:$0xf]
    %v1083 = vld [vmem:[#allocation20 + $0x14] sm:$0xf]
    %v1084 = vld [vmem:[#allocation20 + $0x18] sm:$0xf]
    %v1085 = vld [vmem:[#allocation20 + $0x1c] sm:$0xf]
    %v1086 = vld [vmem:[#allocation20 + $0x20] sm:$0xf]
    %v1087 = vld [vmem:[#allocation20 + $0x24] sm:$0xf]
    %v1088 = vld [vmem:[#allocation20 + $0x28] sm:$0xf]
    %v1089 = vld [vmem:[#allocation20 + $0x2c] sm:$0xf]
    %v1090 = vld [vmem:[#allocation20 + $0x30] sm:$0xf]
    %v1091 = vld [vmem:[#allocation20 + $0x34] sm:$0xf]
    %v1092 = vld [vmem:[#allocation20 + $0x38] sm:$0xf]
    %v1093 = vld [vmem:[#allocation20 + $0x3c] sm:$0xf]
    %v1094 = vld [vmem:[%s19] sm:$0x1]
    %v1096 = vperm.slane %v1094, 0
    %v1114 = vunpack.c.l.b16 %v1078
    %v1115 = vunpack.c.l.b16 %v1079
    %v1116 = vunpack.c.l.b16 %v1080
    %v1117 = vunpack.c.l.b16 %v1081
    %v1118 = vunpack.c.l.b16 %v1082
    %v1119 = vunpack.c.l.b16 %v1083
    %v1120 = vunpack.c.l.b16 %v1084
    %v1121 = vunpack.c.l.b16 %v1085
    %v1122 = vunpack.c.l.b16 %v1086
    %v1123 = vunpack.c.l.b16 %v1087
    %v1124 = vunpack.c.l.b16 %v1088
    %v1125 = vunpack.c.l.b16 %v1089
    %v1126 = vunpack.c.l.b16 %v1090
    %v1127 = vunpack.c.l.b16 %v1091
    %v1128 = vunpack.c.l.b16 %v1092
    %v1129 = vunpack.c.l.b16 %v1093
    %v1130 = vpack.c.b16 %v1115, %v1114
    %v1131 = vpack.c.b16 %v1117, %v1116
    %v1132 = vpack.c.b16 %v1119, %v1118
    %v1133 = vpack.c.b16 %v1121, %v1120
    %v1134 = vpack.c.b16 %v1123, %v1122
    %v1135 = vpack.c.b16 %v1125, %v1124
    %v1136 = vpack.c.b16 %v1127, %v1126
    %v1137 = vpack.c.b16 %v1129, %v1128
    %1146 = vmatpush.bf16.msra.mxu0 %v1137
    %1147 = vmatpush.bf16.msra.mxu0 %v1136
    %1148 = vmatpush.bf16.msra.mxu0 %v1135
    %1149 = vmatpush.bf16.msra.mxu0 %v1134
    %1150 = vmatpush.bf16.msra.mxu0 %v1133
    %1151 = vmatpush.bf16.msra.mxu0 %v1132
    %1152 = vmatpush.bf16.msra.mxu0 %v1131
    %1153 = vmatpush.bf16.msra.mxu0 %v1130
    %1154 = vmatmul.bf16.gmra.mxu0 %v1077
    %v1155 = vpop.f32.mrf.mxu0
    %v1156 = vadd.f32 %v1096, %v1155
    %v1157 = vpop.f32.mrf.mxu0
    %v1158 = vadd.f32 %v1096, %v1157
    %1159 = vdwg.mxu0
    %1160 = vst [vmem:[#allocation22] sm:$0xff] %v1156
    %1161 = vst [vmem:[#allocation22 + $0x8] sm:$0xff] %v1158
    // Predicated region
    $region130: #{tpu_custom_call.1} parent=1 // pred_check
      _
    $region131: #{tpu_custom_call.1} parent=1 // pred_check_branch
      %1163 = sbr.rel (0) target = $region133
    $region132: #{tpu_custom_call.1} parent=1 // pred_region
      %1165 = vsyncadd [#allocation4], 0
      %s1166 = sshll.u32 [#allocation22], 4
      %s1167 = int_to_ptr.vmem [resolvable:$true] %s1166
      %s1168 = sshll.u32 %s20, 4
      %s1169 = int_to_ptr.hbm [resolvable:$true] %s1168
      %1174 = dma.vmem_to_hbm [thread:$0]  %s1167, 256, %s1169, [#allocation4], 128, 128, 8
    $region133: #{tpu_custom_call.1} parent=1 // pred_fallthru
      _
    // Predicated region
    $region134: #{tpu_custom_call.1} parent=1 // pred_check
      _
    $region135: #{tpu_custom_call.1} parent=1 // pred_check_branch
      %1176 = sbr.rel (0) target = $region137
    $region136: #{tpu_custom_call.1} parent=1 // pred_region
      %1178 = dma.done [#allocation4], 256
    $region137: #{tpu_custom_call.1} parent=1 // pred_fallthru
      _
    %1179 = vsyncpa [#allocation3], 1
    %1180 = vsyncpa [#allocation6], 1
    %1181 = vsyncpa [#allocation9], 1
    %1182 = vsyncpa [#allocation12], 1
    %1183 = vsyncpa [#allocation15], 1
    %1184 = vsyncpa [#allocation18], 1
    %1185 = vsyncpa [#allocation21], 1
    %1186 = vsyncpa [#allocation4], 1

</llo_original>
